<compile_context>
chip_gen: v5e
topology: v5e:2x2
jax: 0.10.0
libtpu: 0.0.40
codegen_flags: <defaults>
</compile_context>

<pallas_src>
import functools

import jax
import jax.numpy as jnp
from jax.experimental import pallas as pl
from jax.experimental.pallas import tpu as pltpu


def _dense_kernel(x_ref, t_ref, loss_ref, *, confidence, smoothing, num_classes):
    """Dense / soft targets: t_ref is a (tile_n, C) float tile."""
    x = x_ref[...].astype(jnp.float32)          # (tile_n, C)
    t = t_ref[...].astype(jnp.float32)          # (tile_n, C)

    # Numerically-stable row logsumexp (all f32).
    m = jnp.max(x, axis=-1, keepdims=True)
    shifted = x - m                             # (tile_n, C), <= 0
    lse = jnp.log(jnp.sum(jnp.exp(shifted), axis=-1, keepdims=True))

    # loss_row = -sum((shifted - lse) * w) = lse*sum(w) - sum(shifted*w)
    # (no logprobs materialization).  sum(w) computed exactly — no assumption
    # that the soft targets are normalized.
    base = jnp.float32(smoothing / num_classes)
    w = jnp.float32(confidence) * t + base
    sum_w = (jnp.float32(confidence) * jnp.sum(t, axis=-1, keepdims=True)
             + jnp.float32(smoothing))
    loss_ref[...] = lse * sum_w - jnp.sum(shifted * w, axis=-1, keepdims=True)


def _int_label_kernel(x_ref, lbl_ref, loss_ref, *, confidence, smoothing,
                      num_classes):
    """Hard integer labels: lbl_ref is (tile_n, 1) int32 — no dense target read."""
    x = x_ref[...].astype(jnp.float32)          # (tile_n, C)
    lbl = lbl_ref[...]                          # (tile_n, 1) int32

    m = jnp.max(x, axis=-1, keepdims=True)
    shifted = x - m
    lse = jnp.log(jnp.sum(jnp.exp(shifted), axis=-1, keepdims=True))

    # w = confidence*onehot(lbl) + smoothing/C, built from a lane iota.
    # sum(w) == confidence + smoothing == 1 exactly, so lse is unscaled.
    base = jnp.float32(smoothing / num_classes)
    col = jax.lax.broadcasted_iota(jnp.int32, x.shape, 1)
    w = jnp.where(col == lbl, jnp.float32(confidence) + base, base)
    loss_ref[...] = lse - jnp.sum(shifted * w, axis=-1, keepdims=True)


def _round_up(a, b):
    return ((a + b - 1) // b) * b


def _choose_tile_n(N, C, x_itemsize, t_row_bytes, vmem_budget_bytes):
    # Double-buffered input tiles + ~3 f32 (tile_n, C) temporaries
    # (shifted, exp(shifted), shifted*w).
    per_row_bytes = 2 * (C * x_itemsize + t_row_bytes) + 3 * C * 4
    vmem_cap = max(8, vmem_budget_bytes // per_row_bytes)
    # Aim for >= ~4 grid steps (megacore sharding on v7x + pipeline overlap)
    # but never below 256 rows/tile (per-step overhead, v5e HBM roofline)
    # unless N itself is smaller.
    split_target = _round_up(max(1, pl.cdiv(N, 4)), 8)
    tile_n = min(vmem_cap, 1024, max(split_target, 256), _round_up(N, 8))
    tile_n = max(8, (int(tile_n) // 8) * 8)
    return tile_n, per_row_bytes


def label_smoothing_loss(x, target, smoothing=0.05, tile_n=None,
                         vmem_budget_bytes=16 * 1024 * 1024):
    """Training-mode LabelSmoothing.forward.

    x: (N, C) logits.
    target: (N, C) float soft targets (matches the PyTorch forward), or
            (N,) integer class labels (fast path: never reads a dense target).
    Returns a scalar f32 loss.
    """
    confidence = 1.0 - smoothing
    N, C = x.shape
    int_labels = target.ndim == 1

    if int_labels:
        assert target.shape == (N,), (x.shape, target.shape)
        t_arr = target.astype(jnp.int32).reshape(N, 1)
        t_row_bytes = 4
        t_bytes_total = N * 4
    else:
        assert target.shape == (N, C), (x.shape, target.shape)
        t_arr = target
        t_row_bytes = C * target.dtype.itemsize
        t_bytes_total = N * C * target.dtype.itemsize

    auto_tile, per_row_bytes = _choose_tile_n(
        N, C, x.dtype.itemsize, t_row_bytes, vmem_budget_bytes)
    if tile_n is None:
        tile_n = auto_tile
    tile_n = max(8, (min(int(tile_n), _round_up(N, 8)) // 8) * 8)

    num_tiles = pl.cdiv(N, tile_n)
    n_pad = num_tiles * tile_n

    # VMEM limit derived from the actual footprint (v7x only has 64 MiB
    # physical; v5e's scoped default is only 16 MiB so it must be set).
    footprint = tile_n * per_row_bytes + 4 * tile_n * 4
    vmem_limit = int(min(40 * 1024 * 1024, max(16 * 1024 * 1024, 2 * footprint)))

    if int_labels:
        kernel = functools.partial(_int_label_kernel, confidence=confidence,
                                   smoothing=smoothing, num_classes=C)
        t_spec = pl.BlockSpec((tile_n, 1), lambda i: (i, 0))
    else:
        kernel = functools.partial(_dense_kernel, confidence=confidence,
                                   smoothing=smoothing, num_classes=C)
        t_spec = pl.BlockSpec((tile_n, C), lambda i: (i, 0))

    cost = pl.CostEstimate(
        flops=int(6 * N * C),
        transcendentals=int(N * C),
        bytes_accessed=int(N * C * x.dtype.itemsize + t_bytes_total + N * 4),
    )

    per_row_losses = pl.pallas_call(
        kernel,
        out_shape=jax.ShapeDtypeStruct((n_pad, 1), jnp.float32),
        grid=(num_tiles,),
        in_specs=[pl.BlockSpec((tile_n, C), lambda i: (i, 0)), t_spec],
        out_specs=pl.BlockSpec((tile_n, 1), lambda i: (i, 0)),
        compiler_params=pltpu.CompilerParams(
            dimension_semantics=("parallel",),
            vmem_limit_bytes=vmem_limit,
        ),
        cost_estimate=cost,
    )(x, t_arr)

    # Rows >= N (padded tail of the last tile) are sliced off here, so any
    # garbage they contain never reaches the mean; divisor stays the true N.
    return jnp.sum(per_row_losses[:N, 0]) / jnp.float32(N)


def _reference_loss(x, target, smoothing=0.05):
    confidence = 1.0 - smoothing
    x = x.astype(jnp.float32)
    target = target.astype(jnp.float32)
    logprobs = jax.nn.log_softmax(x, axis=-1)
    nll_loss = jnp.sum(-logprobs * target, axis=-1)
    smooth_loss = -jnp.mean(logprobs, axis=-1)
    loss = confidence * nll_loss + smoothing * smooth_loss
    return jnp.mean(loss)


if __name__ == "__main__":
    key = jax.random.PRNGKey(0)
    kx, kt = jax.random.split(key)

    N, C = 300, 512     # N deliberately NOT a multiple of the tile size
    x = jax.random.normal(kx, (N, C), dtype=jnp.float32)
    labels = jax.random.randint(kt, (N,), 0, C)
    target = jax.nn.one_hot(labels, C, dtype=jnp.float32)

    ref = _reference_loss(x, target, smoothing=0.05)

    # 1) Dense soft-target path (exact PyTorch forward signature).
    out = jax.block_until_ready(label_smoothing_loss(x, target, smoothing=0.05))
    assert jnp.allclose(out, ref, rtol=1e-5, atol=1e-5), (out, ref)

    # 2) Integer-label fast path (skips the (N, C) target read entirely).
    out_int = jax.block_until_ready(label_smoothing_loss(x, labels, smoothing=0.05))
    assert jnp.allclose(out_int, ref, rtol=1e-5, atol=1e-5), (out_int, ref)

    # 3) Forced smaller tile -> several parallel grid steps incl. a partial
    #    last tile, exercising the ragged-N path.
    out_tiled = jax.block_until_ready(
        label_smoothing_loss(x, target, smoothing=0.05, tile_n=128))
    assert jnp.allclose(out_tiled, ref, rtol=1e-5, atol=1e-5), (out_tiled, ref)

    # 4) bf16 inputs (half the HBM traffic); kernel upcasts to f32 internally.
    x_bf16 = x.astype(jnp.bfloat16)
    t_bf16 = target.astype(jnp.bfloat16)
    ref_bf16 = _reference_loss(x_bf16, t_bf16, smoothing=0.05)
    out_bf16 = jax.block_until_ready(
        label_smoothing_loss(x_bf16, t_bf16, smoothing=0.05))
    assert jnp.allclose(out_bf16, ref_bf16, rtol=1e-4, atol=1e-4), (out_bf16, ref_bf16)
    out_bf16_int = jax.block_until_ready(
        label_smoothing_loss(x_bf16, labels, smoothing=0.05))
    assert jnp.allclose(out_bf16_int, ref_bf16, rtol=1e-4, atol=1e-4), (
        out_bf16_int, ref_bf16)

    # 5) smoothing=0 on the int-label path == plain cross entropy
    #    (the module's eval-mode branch for integer targets).
    ref_ce = _reference_loss(x, target, smoothing=0.0)
    out_ce = jax.block_until_ready(label_smoothing_loss(x, labels, smoothing=0.0))
    assert jnp.allclose(out_ce, ref_ce, rtol=1e-5, atol=1e-5), (out_ce, ref_ce)

    print("KERNEL_OK")
</pallas_src>

<mosaic_0001>
module attributes {stable_mosaic.version = 11 : i64} {
  func.func @_dense_kernel(%arg0: i32, %arg1: memref<256x512xf32, #tpu.memory_space<vmem>>, %arg2: memref<256x512xf32, #tpu.memory_space<vmem>>, %arg3: memref<256x1xf32, #tpu.memory_space<vmem>>) attributes {dimension_semantics = [#tpu.dimension_semantics<parallel>], iteration_bounds = array<i64: 2>, scalar_prefetch = 0 : i64, scratch_operands = 0 : i64, tpu.core_type = #tpu.core_type<tc>, window_params = [{transform_indices = @transform_0, window_bounds = array<i64: 256, 512>}, {transform_indices = @transform_1, window_bounds = array<i64: 256, 512>}, {transform_indices = @transform_2, window_bounds = array<i64: 256, 1>}]} {
    %c0 = arith.constant 0 : index
    %c0_0 = arith.constant 0 : index
    %0 = vector.load %arg1[%c0, %c0_0] : memref<256x512xf32, #tpu.memory_space<vmem>>, vector<256x512xf32>
    %c0_1 = arith.constant 0 : index
    %c0_2 = arith.constant 0 : index
    %1 = vector.load %arg2[%c0_1, %c0_2] : memref<256x512xf32, #tpu.memory_space<vmem>>, vector<256x512xf32>
    %cst = arith.constant dense<0xFF800000> : vector<256xf32>
    %2 = vector.multi_reduction <maximumf>, %0, %cst [1] : vector<256x512xf32> to vector<256xf32>
    %3 = vector.shape_cast %2 : vector<256xf32> to vector<256x1xf32>
    %4 = vector.broadcast %3 : vector<256x1xf32> to vector<256x512xf32>
    %5 = arith.subf %0, %4 : vector<256x512xf32>
    %6 = math.exp %5 : vector<256x512xf32>
    %cst_3 = arith.constant dense<0.000000e+00> : vector<256xf32>
    %7 = vector.multi_reduction <add>, %6, %cst_3 [1] : vector<256x512xf32> to vector<256xf32>
    %8 = vector.shape_cast %7 : vector<256xf32> to vector<256x1xf32>
    %9 = math.log %8 : vector<256x1xf32>
    %cst_4 = arith.constant 0.949999988 : f32
    %10 = vector.broadcast %cst_4 : f32 to vector<256x512xf32>
    %11 = arith.mulf %10, %1 : vector<256x512xf32>
    %cst_5 = arith.constant 9.76562514E-5 : f32
    %12 = vector.broadcast %cst_5 : f32 to vector<256x512xf32>
    %13 = arith.addf %11, %12 : vector<256x512xf32>
    %cst_6 = arith.constant dense<0.000000e+00> : vector<256xf32>
    %14 = vector.multi_reduction <add>, %1, %cst_6 [1] : vector<256x512xf32> to vector<256xf32>
    %15 = vector.shape_cast %14 : vector<256xf32> to vector<256x1xf32>
    %cst_7 = arith.constant 0.949999988 : f32
    %16 = vector.broadcast %cst_7 : f32 to vector<256x1xf32>
    %17 = arith.mulf %16, %15 : vector<256x1xf32>
    %cst_8 = arith.constant 5.000000e-02 : f32
    %18 = vector.broadcast %cst_8 : f32 to vector<256x1xf32>
    %19 = arith.addf %17, %18 : vector<256x1xf32>
    %20 = arith.mulf %9, %19 : vector<256x1xf32>
    %21 = arith.mulf %5, %13 : vector<256x512xf32>
    %cst_9 = arith.constant dense<0.000000e+00> : vector<256xf32>
    %22 = vector.multi_reduction <add>, %21, %cst_9 [1] : vector<256x512xf32> to vector<256xf32>
    %23 = vector.shape_cast %22 : vector<256xf32> to vector<256x1xf32>
    %24 = arith.subf %20, %23 : vector<256x1xf32>
    %c0_10 = arith.constant 0 : index
    %c0_11 = arith.constant 0 : index
    %25 = vector.load %arg3[%c0_10, %c0_11] : memref<256x1xf32, #tpu.memory_space<vmem>>, vector<256x1xf32>
    tpu.vector_store %arg3[%c0_10, %c0_11], %24 {strides = array<i32>} : memref<256x1xf32, #tpu.memory_space<vmem>>, vector<256x1xf32>,
    return
  }
  func.func @transform_0(%arg0: i32) -> (i32, i32) {
    %c0_i32 = arith.constant 0 : i32
    %c0_i32_0 = arith.constant 0 : i32
    return %arg0, %c0_i32 : i32, i32
  }
  func.func @transform_1(%arg0: i32) -> (i32, i32) {
    %c0_i32 = arith.constant 0 : i32
    %c0_i32_0 = arith.constant 0 : i32
    return %arg0, %c0_i32 : i32, i32
  }
  func.func @transform_2(%arg0: i32) -> (i32, i32) {
    %c0_i32 = arith.constant 0 : i32
    %c0_i32_0 = arith.constant 0 : i32
    return %arg0, %c0_i32 : i32, i32
  }
}

</mosaic_0001>

<llo_original>
// kernel: tpu_custom_call.1
$region0: #{tpu_custom_call.1}
  #allocation0 [shape = 'u32[]', space=smem, size = 0x4, offset = 0x4, fixed_abs, tag = 'smem constant byte address 0x4 - core index']
  #allocation1 [shape = 'u32[72,128]{1,0:T(1,128)}', space=vmem, size = 0x9000, scoped, tag = 'internal scratch']
  %s0 = inlined_call_operand.hbm [shape: f32[300,512], index: 0, kind: input, shape index: {}]
  %s1 = inlined_call_operand.hbm [shape: f32[300,512], index: 1, kind: input, shape index: {}]
  %s2 = inlined_call_operand.vmem [shape: f32[512,1], index: 2, kind: output, shape index: {}]
  %s3 = sld [smem:[#allocation0]]
  $region49: #{tpu_custom_call.1} parent=0
    _
  %s5 = ssub.s32 1, %s3
  %s6 = scalar_select 0, %s5, %s3
  $region1: #{tpu_custom_call.1} parent=0
    #allocation2 [shape = 'u8[1048576]{0}', space=vmem, size = 0x100000, scoped, tag = 'input window, operand 0']
    #allocation3 [shape = 's32[2]{0}', space=sflag, size = 0x8, scoped, tag = 'scoped memory for tpu_custom_call.1']
    #allocation4 [shape = 'u8[1048576]{0}', space=vmem, size = 0x100000, scoped, tag = 'input window, operand 1']
    #allocation5 [shape = 's32[2]{0}', space=sflag, size = 0x8, scoped, tag = 'scoped memory for tpu_custom_call.1']
    %7 = vsyncpa [#allocation3], 0
    %s8 = scalar_lea.sflag [#allocation3], 1
    %9 = vsyncpa %s8, 0
    %10 = vsyncpa [#allocation5], 0
    %s11 = scalar_lea.sflag [#allocation5], 1
    %12 = vsyncpa %s11, 0
    loop: start=0, step=1, limit=4
    $region2: #{tpu_custom_call.1} parent=1 // loop_pre_header
      _
    $region3: #{tpu_custom_call.1} parent=1 // loop_header
      %s14 = sphi 0, %s18
      %p15 = scmp.ge.s32.totalorder %s14, 4
      %s24 = sphi 0, %s26
      %s27 = sphi 0, %s24
      %s28 = sphi 0, %s27
      %s44 = sphi 0, %s28
      %s50 = sphi 0, %s52
      %s53 = sphi 0, %s50
      %s54 = sphi 0, %s53
      %s70 = sphi 0, %s54
      %s76 = sphi 0, %s78
      %s79 = sphi 0, %s76
      %s80 = sphi 0, %s79
      %s96 = sphi 0, %s80
    $region4: #{tpu_custom_call.1} parent=1 // loop_header_branch
      %17 = sbr.rel (%p15) target = $region8
    $region5: #{tpu_custom_call.1} parent=1 // loop_body
      %s19 = ssub.s32 %s14, 1
      %s20 = ssub.s32 %s14, 2
      %s21 = sadd.s32 %s14, 1
      %s22 = ssub.s32 %s14, %s21
      %p23 = scmp.eq.s32.totalorder %s22, 0
      %s25 = sadd.s32 %s24, 1
      %s26 = scalar_select %p23, %s24, %s25
      %p29 = pneg %p23
      %p30 = scmp.eq.s32.totalorder %s14, 1
      %p31 = por %p29, %p30
      %p32 = scmp.ne.s32.totalorder %s24, %s27
      %p33 = scmp.eq.s32.totalorder %s14, 0
      %p34 = por %p32, %p33
      %p35 = scmp.ne.s32.totalorder %s24, %s27
      %p36 = scmp.eq.s32.totalorder %s19, 1
      %p37 = por %p35, %p36
      %p38 = scmp.ne.s32.totalorder %s27, %s28
      %p39 = scmp.eq.s32.totalorder %s19, 0
      %p40 = por %p38, %p39
      %p41 = scmp.ne.s32.totalorder %s27, %s28
      %p42 = scmp.eq.s32.totalorder %s20, 1
      %p43 = por %p41, %p42
      %p45 = scmp.ne.s32.totalorder %s28, %s44
      %p46 = scmp.eq.s32.totalorder %s20, 0
      %p47 = por %p45, %p46
      %s48 = ssub.s32 %s14, %s21
      %p49 = scmp.eq.s32.totalorder %s48, 0
      %s51 = sadd.s32 %s50, 1
      %s52 = scalar_select %p49, %s50, %s51
      %p55 = pneg %p49
      %p56 = scmp.eq.s32.totalorder %s14, 1
      %p57 = por %p55, %p56
      %p58 = scmp.ne.s32.totalorder %s50, %s53
      %p59 = scmp.eq.s32.totalorder %s14, 0
      %p60 = por %p58, %p59
      %p61 = scmp.ne.s32.totalorder %s50, %s53
      %p62 = scmp.eq.s32.totalorder %s19, 1
      %p63 = por %p61, %p62
      %p64 = scmp.ne.s32.totalorder %s53, %s54
      %p65 = scmp.eq.s32.totalorder %s19, 0
      %p66 = por %p64, %p65
      %p67 = scmp.ne.s32.totalorder %s53, %s54
      %p68 = scmp.eq.s32.totalorder %s20, 1
      %p69 = por %p67, %p68
      %p71 = scmp.ne.s32.totalorder %s54, %s70
      %p72 = scmp.eq.s32.totalorder %s20, 0
      %p73 = por %p71, %p72
      %s74 = ssub.s32 %s14, %s21
      %p75 = scmp.eq.s32.totalorder %s74, 0
      %s77 = sadd.s32 %s76, 1
      %s78 = scalar_select %p75, %s76, %s77
      %p81 = pneg %p75
      %p82 = scmp.eq.s32.totalorder %s14, 1
      %p83 = por %p81, %p82
      %p84 = scmp.ne.s32.totalorder %s76, %s79
      %p85 = scmp.eq.s32.totalorder %s14, 0
      %p86 = por %p84, %p85
      %p87 = scmp.ne.s32.totalorder %s76, %s79
      %p88 = scmp.eq.s32.totalorder %s19, 1
      %p89 = por %p87, %p88
      %p90 = scmp.ne.s32.totalorder %s79, %s80
      %p91 = scmp.eq.s32.totalorder %s19, 0
      %p92 = por %p90, %p91
      %p93 = scmp.ne.s32.totalorder %s79, %s80
      %p94 = scmp.eq.s32.totalorder %s20, 1
      %p95 = por %p93, %p94
      %p97 = scmp.ne.s32.totalorder %s80, %s96
      %p98 = scmp.eq.s32.totalorder %s20, 0
      %p99 = por %p97, %p98
      %p100 = scmp.le.s32.totalorder 1, %s14
      %p101 = scmp.lt.s32.totalorder %s14, 3
      %p102 = pnand %p100, %p101
      %p103 = pneg %p102
      // Predicated region
      $region9: #{tpu_custom_call.1} parent=5 // pred_check
        _
      $region10: #{tpu_custom_call.1} parent=5 // pred_check_branch
        %105 = sbr.rel (%p102) target = $region12
      $region11: #{tpu_custom_call.1} parent=5 // pred_region
        %s106 = ssub.s32 %s14, 1
      $region12: #{tpu_custom_call.1} parent=5 // pred_fallthru
        _
      %p107 = scmp.lt.s32.totalorder %s14, 2
      // Predicated region
      $region13: #{tpu_custom_call.1} parent=5 // pred_check
        %p108 = pneg %p107
      $region14: #{tpu_custom_call.1} parent=5 // pred_check_branch
        %110 = sbr.rel (%p108) target = $region16
      $region15: #{tpu_custom_call.1} parent=5 // pred_region
        // Predicated region
        $region17: #{tpu_custom_call.1} parent=15 // pred_check
          %p111 = pneg %p34
        $region18: #{tpu_custom_call.1} parent=15 // pred_check_branch
          %113 = sbr.rel (%p111) target = $region20
        $region19: #{tpu_custom_call.1} parent=15 // pred_region
          %s114 = sand.u32 %s24, 1
          %s115 = scalar_lea.sflag [#allocation3], %s114
          %s116 = sand.u32 %s24, 1
          %s117 = smul.addr %s116, 1024
          %s118 = scalar_lea.vmem [#allocation2], %s117
          %s119 = smul.u32 32, %s14
          %s120 = ssub.s32 38, %s119
          %p121 = scmp.lt.s32.totalorder %s120, 32
          %s122 = scalar_select %p121, %s120, 32
          %s123 = smul.u32 8, %s122
          %s124 = smul.u32 %s123, 4
          %s125 = ssub.s32 1024, %s124
          %s126 = sshll.u32 %s125, 4
          %127 = vsyncadd %s115, %s126
          %p128 = scmp.ne.s32.totalorder 0, %s124
          %s129 = smul.addr %s119, 4
          %s130 = smul.addr %s129, 8
          %s131 = scalar_lea.hbm %s0, %s130
          %s132 = smul.u32 32, %s122
          %s133 = sshll.u32 %s131, 4
          %s134 = int_to_ptr.hbm [resolvable:$true] %s133
          %s135 = sshll.u32 %s118, 4
          %s136 = int_to_ptr.vmem [resolvable:$true] %s135
          %s137 = sshll.u32 %s132, 4
          %141 = dma.hbm_to_vmem [thread:$0]  (%p128), %s134, %s137, %s136, %s115, 512, 512, 32
        $region20: #{tpu_custom_call.1} parent=15 // pred_fallthru
          _
        // Predicated region
        $region21: #{tpu_custom_call.1} parent=15 // pred_check
          %p142 = pneg %p60
        $region22: #{tpu_custom_call.1} parent=15 // pred_check_branch
          %144 = sbr.rel (%p142) target = $region24
        $region23: #{tpu_custom_call.1} parent=15 // pred_region
          %s145 = sand.u32 %s50, 1
          %s146 = scalar_lea.sflag [#allocation5], %s145
          %s147 = sand.u32 %s50, 1
          %s148 = smul.addr %s147, 1024
          %s149 = scalar_lea.vmem [#allocation4], %s148
          %s150 = smul.u32 32, %s14
          %s151 = ssub.s32 38, %s150
          %p152 = scmp.lt.s32.totalorder %s151, 32
          %s153 = scalar_select %p152, %s151, 32
          %s154 = smul.u32 8, %s153
          %s155 = smul.u32 %s154, 4
          %s156 = ssub.s32 1024, %s155
          %s157 = sshll.u32 %s156, 4
          %158 = vsyncadd %s146, %s157
          %p159 = scmp.ne.s32.totalorder 0, %s155
          %s160 = smul.addr %s150, 4
          %s161 = smul.addr %s160, 8
          %s162 = scalar_lea.hbm %s1, %s161
          %s163 = smul.u32 32, %s153
          %s164 = sshll.u32 %s162, 4
          %s165 = int_to_ptr.hbm [resolvable:$true] %s164
          %s166 = sshll.u32 %s149, 4
          %s167 = int_to_ptr.vmem [resolvable:$true] %s166
          %s168 = sshll.u32 %s163, 4
          %172 = dma.hbm_to_vmem [thread:$0]  (%p159), %s165, %s168, %s167, %s146, 512, 512, 32
        $region24: #{tpu_custom_call.1} parent=15 // pred_fallthru
          _
      $region16: #{tpu_custom_call.1} parent=5 // pred_fallthru
        _
      %p173 = scmp.le.s32.totalorder 1, %s14
      %p174 = scmp.lt.s32.totalorder %s14, 3
      %p175 = pnand %p173, %p174
      %p176 = pneg %p175
      // Predicated region
      $region25: #{tpu_custom_call.1} parent=5 // pred_check
        _
      $region26: #{tpu_custom_call.1} parent=5 // pred_check_branch
        %178 = sbr.rel (%p175) target = $region28
      $region27: #{tpu_custom_call.1} parent=5 // pred_region
        %s179 = ssub.s32 %s14, 1
        %s180 = sand.u32 %s27, 1
        %s181 = scalar_lea.sflag [#allocation3], %s180
        %s182 = sand.u32 %s27, 1
        %s183 = smul.addr %s182, 1024
        %s184 = scalar_lea.vmem [#allocation2], %s183
        // Predicated region
        $region29: #{tpu_custom_call.1} parent=27 // pred_check
          %p185 = pneg %p40
        $region30: #{tpu_custom_call.1} parent=27 // pred_check_branch
          %187 = sbr.rel (%p185) target = $region32
        $region31: #{tpu_custom_call.1} parent=27 // pred_region
          %189 = dma.done %s181, 16384
        $region32: #{tpu_custom_call.1} parent=27 // pred_fallthru
          _
        %s190 = sand.u32 %s53, 1
        %s191 = scalar_lea.sflag [#allocation5], %s190
        %s192 = sand.u32 %s53, 1
        %s193 = smul.addr %s192, 1024
        %s194 = scalar_lea.vmem [#allocation4], %s193
        // Predicated region
        $region33: #{tpu_custom_call.1} parent=27 // pred_check
          %p195 = pneg %p66
        $region34: #{tpu_custom_call.1} parent=27 // pred_check_branch
          %197 = sbr.rel (%p195) target = $region36
        $region35: #{tpu_custom_call.1} parent=27 // pred_region
          %199 = dma.done %s191, 16384
        $region36: #{tpu_custom_call.1} parent=27 // pred_fallthru
          _
        %s200 = sand.u32 %s27, 1
        %s201 = scalar_lea.sflag [#allocation3], %s200
        %s202 = sand.u32 %s27, 1
        %s203 = smul.addr %s202, 1024
        %s204 = scalar_lea.vmem [#allocation2], %s203
        %p205 = pneg %p40
        %p206 = pneg %p37
        %s207 = sand.u32 %s53, 1
        %s208 = scalar_lea.sflag [#allocation5], %s207
        %s209 = sand.u32 %s53, 1
        %s210 = smul.addr %s209, 1024
        %s211 = scalar_lea.vmem [#allocation4], %s210
        %p212 = pneg %p66
        %p213 = pneg %p63
        %p214 = pneg %p92
        %p215 = pneg %p89
        %s216 = smul.u32 32, %s19
        %p217 = scmp.lt.s32.totalorder %s216, 63
        %s218 = scalar_select %p217, %s216, 63
        %s219 = smul.addr %s218, 8
        %s220 = scalar_lea.vmem %s2, %s219
        %s221 = smul.u32 32, %s19
        %s222 = ssub.s32 38, %s221
        %p223 = scmp.lt.s32.totalorder %s222, 32
        %s224 = scalar_select %p223, %s222, 32
        %s225 = smul.u32 8, %s224
        %s226 = smul.u32 %s225, 4
        %s227 = smul.u32 32, %s19
        %s228 = ssub.s32 38, %s227
        %p229 = scmp.lt.s32.totalorder %s228, 32
        %s230 = scalar_select %p229, %s228, 32
        %s231 = smul.u32 8, %s230
        %s232 = smul.u32 %s231, 4
        %s233 = smul.u32 32, %s19
        %p234 = scmp.lt.s32.totalorder %s233, 63
        %s235 = scalar_select %p234, %s233, 63
        %s236 = smul.addr %s235, 8
        %s237 = scalar_lea.vmem %s2, %s236
        %s238 = smul.u32 32, %s19
        %v239 = vld [vmem:[%s184] sm:$0xff]
        %v240 = vld [vmem:[%s184 + $0x8] sm:$0xff]
        %v241 = vld [vmem:[%s184 + $0x10] sm:$0xff]
        %v242 = vld [vmem:[%s184 + $0x18] sm:$0xff]
        %v243 = vld [vmem:[%s184 + $0x20] sm:$0xff]
        %v244 = vld [vmem:[%s184 + $0x28] sm:$0xff]
        %v245 = vld [vmem:[%s184 + $0x30] sm:$0xff]
        %v246 = vld [vmem:[%s184 + $0x38] sm:$0xff]
        %v247 = vld [vmem:[%s184 + $0x40] sm:$0xff]
        %v248 = vld [vmem:[%s184 + $0x48] sm:$0xff]
        %v249 = vld [vmem:[%s184 + $0x50] sm:$0xff]
        %v250 = vld [vmem:[%s184 + $0x58] sm:$0xff]
        %v251 = vld [vmem:[%s184 + $0x60] sm:$0xff]
        %v252 = vld [vmem:[%s184 + $0x68] sm:$0xff]
        %v253 = vld [vmem:[%s184 + $0x70] sm:$0xff]
        %v254 = vld [vmem:[%s184 + $0x78] sm:$0xff]
        %v255 = vld [vmem:[%s184 + $0x80] sm:$0xff]
        %v256 = vld [vmem:[%s184 + $0x88] sm:$0xff]
        %v257 = vld [vmem:[%s184 + $0x90] sm:$0xff]
        %v258 = vld [vmem:[%s184 + $0x98] sm:$0xff]
        %v259 = vld [vmem:[%s184 + $0xa0] sm:$0xff]
        %v260 = vld [vmem:[%s184 + $0xa8] sm:$0xff]
        %v261 = vld [vmem:[%s184 + $0xb0] sm:$0xff]
        %v262 = vld [vmem:[%s184 + $0xb8] sm:$0xff]
        %v263 = vld [vmem:[%s184 + $0xc0] sm:$0xff]
        %v264 = vld [vmem:[%s184 + $0xc8] sm:$0xff]
        %v265 = vld [vmem:[%s184 + $0xd0] sm:$0xff]
        %v266 = vld [vmem:[%s184 + $0xd8] sm:$0xff]
        %v267 = vld [vmem:[%s184 + $0xe0] sm:$0xff]
        %v268 = vld [vmem:[%s184 + $0xe8] sm:$0xff]
        %v269 = vld [vmem:[%s184 + $0xf0] sm:$0xff]
        %v270 = vld [vmem:[%s184 + $0xf8] sm:$0xff]
        %v271 = vld [vmem:[%s184 + $0x100] sm:$0xff]
        %v272 = vld [vmem:[%s184 + $0x108] sm:$0xff]
        %v273 = vld [vmem:[%s184 + $0x110] sm:$0xff]
        %v274 = vld [vmem:[%s184 + $0x118] sm:$0xff]
        %v275 = vld [vmem:[%s184 + $0x120] sm:$0xff]
        %v276 = vld [vmem:[%s184 + $0x128] sm:$0xff]
        %v277 = vld [vmem:[%s184 + $0x130] sm:$0xff]
        %v278 = vld [vmem:[%s184 + $0x138] sm:$0xff]
        %v279 = vld [vmem:[%s184 + $0x140] sm:$0xff]
        %v280 = vld [vmem:[%s184 + $0x148] sm:$0xff]
        %v281 = vld [vmem:[%s184 + $0x150] sm:$0xff]
        %v282 = vld [vmem:[%s184 + $0x158] sm:$0xff]
        %v283 = vld [vmem:[%s184 + $0x160] sm:$0xff]
        %v284 = vld [vmem:[%s184 + $0x168] sm:$0xff]
        %v285 = vld [vmem:[%s184 + $0x170] sm:$0xff]
        %v286 = vld [vmem:[%s184 + $0x178] sm:$0xff]
        %v287 = vld [vmem:[%s184 + $0x180] sm:$0xff]
        %v288 = vld [vmem:[%s184 + $0x188] sm:$0xff]
        %v289 = vld [vmem:[%s184 + $0x190] sm:$0xff]
        %v290 = vld [vmem:[%s184 + $0x198] sm:$0xff]
        %v291 = vld [vmem:[%s184 + $0x1a0] sm:$0xff]
        %v292 = vld [vmem:[%s184 + $0x1a8] sm:$0xff]
        %v293 = vld [vmem:[%s184 + $0x1b0] sm:$0xff]
        %v294 = vld [vmem:[%s184 + $0x1b8] sm:$0xff]
        %v295 = vld [vmem:[%s184 + $0x1c0] sm:$0xff]
        %v296 = vld [vmem:[%s184 + $0x1c8] sm:$0xff]
        %v297 = vld [vmem:[%s184 + $0x1d0] sm:$0xff]
        %v298 = vld [vmem:[%s184 + $0x1d8] sm:$0xff]
        %v299 = vld [vmem:[%s184 + $0x1e0] sm:$0xff]
        %v300 = vld [vmem:[%s184 + $0x1e8] sm:$0xff]
        %v301 = vld [vmem:[%s184 + $0x1f0] sm:$0xff]
        %v302 = vld [vmem:[%s184 + $0x1f8] sm:$0xff]
        %v303 = vld [vmem:[%s184 + $0x200] sm:$0xff]
        %v304 = vld [vmem:[%s184 + $0x208] sm:$0xff]
        %v305 = vld [vmem:[%s184 + $0x210] sm:$0xff]
        %v306 = vld [vmem:[%s184 + $0x218] sm:$0xff]
        %v307 = vld [vmem:[%s184 + $0x220] sm:$0xff]
        %v308 = vld [vmem:[%s184 + $0x228] sm:$0xff]
        %v309 = vld [vmem:[%s184 + $0x230] sm:$0xff]
        %v310 = vld [vmem:[%s184 + $0x238] sm:$0xff]
        %v311 = vld [vmem:[%s184 + $0x240] sm:$0xff]
        %v312 = vld [vmem:[%s184 + $0x248] sm:$0xff]
        %v313 = vld [vmem:[%s184 + $0x250] sm:$0xff]
        %v314 = vld [vmem:[%s184 + $0x258] sm:$0xff]
        %v315 = vld [vmem:[%s184 + $0x260] sm:$0xff]
        %v316 = vld [vmem:[%s184 + $0x268] sm:$0xff]
        %v317 = vld [vmem:[%s184 + $0x270] sm:$0xff]
        %v318 = vld [vmem:[%s184 + $0x278] sm:$0xff]
        %v319 = vld [vmem:[%s184 + $0x280] sm:$0xff]
        %v320 = vld [vmem:[%s184 + $0x288] sm:$0xff]
        %v321 = vld [vmem:[%s184 + $0x290] sm:$0xff]
        %v322 = vld [vmem:[%s184 + $0x298] sm:$0xff]
        %v323 = vld [vmem:[%s184 + $0x2a0] sm:$0xff]
        %v324 = vld [vmem:[%s184 + $0x2a8] sm:$0xff]
        %v325 = vld [vmem:[%s184 + $0x2b0] sm:$0xff]
        %v326 = vld [vmem:[%s184 + $0x2b8] sm:$0xff]
        %v327 = vld [vmem:[%s184 + $0x2c0] sm:$0xff]
        %v328 = vld [vmem:[%s184 + $0x2c8] sm:$0xff]
        %v329 = vld [vmem:[%s184 + $0x2d0] sm:$0xff]
        %v330 = vld [vmem:[%s184 + $0x2d8] sm:$0xff]
        %v331 = vld [vmem:[%s184 + $0x2e0] sm:$0xff]
        %v332 = vld [vmem:[%s184 + $0x2e8] sm:$0xff]
        %v333 = vld [vmem:[%s184 + $0x2f0] sm:$0xff]
        %v334 = vld [vmem:[%s184 + $0x2f8] sm:$0xff]
        %v335 = vld [vmem:[%s184 + $0x300] sm:$0xff]
        %v336 = vld [vmem:[%s184 + $0x308] sm:$0xff]
        %v337 = vld [vmem:[%s184 + $0x310] sm:$0xff]
        %v338 = vld [vmem:[%s184 + $0x318] sm:$0xff]
        %v339 = vld [vmem:[%s184 + $0x320] sm:$0xff]
        %v340 = vld [vmem:[%s184 + $0x328] sm:$0xff]
        %v341 = vld [vmem:[%s184 + $0x330] sm:$0xff]
        %v342 = vld [vmem:[%s184 + $0x338] sm:$0xff]
        %v343 = vld [vmem:[%s184 + $0x340] sm:$0xff]
        %v344 = vld [vmem:[%s184 + $0x348] sm:$0xff]
        %v345 = vld [vmem:[%s184 + $0x350] sm:$0xff]
        %v346 = vld [vmem:[%s184 + $0x358] sm:$0xff]
        %v347 = vld [vmem:[%s184 + $0x360] sm:$0xff]
        %v348 = vld [vmem:[%s184 + $0x368] sm:$0xff]
        %v349 = vld [vmem:[%s184 + $0x370] sm:$0xff]
        %v350 = vld [vmem:[%s184 + $0x378] sm:$0xff]
        %v351 = vld [vmem:[%s184 + $0x380] sm:$0xff]
        %v352 = vld [vmem:[%s184 + $0x388] sm:$0xff]
        %v353 = vld [vmem:[%s184 + $0x390] sm:$0xff]
        %v354 = vld [vmem:[%s184 + $0x398] sm:$0xff]
        %v355 = vld [vmem:[%s184 + $0x3a0] sm:$0xff]
        %v356 = vld [vmem:[%s184 + $0x3a8] sm:$0xff]
        %v357 = vld [vmem:[%s184 + $0x3b0] sm:$0xff]
        %v358 = vld [vmem:[%s184 + $0x3b8] sm:$0xff]
        %v359 = vld [vmem:[%s184 + $0x3c0] sm:$0xff]
        %v360 = vld [vmem:[%s184 + $0x3c8] sm:$0xff]
        %v361 = vld [vmem:[%s184 + $0x3d0] sm:$0xff]
        %v362 = vld [vmem:[%s184 + $0x3d8] sm:$0xff]
        %v363 = vld [vmem:[%s184 + $0x3e0] sm:$0xff]
        %v364 = vld [vmem:[%s184 + $0x3e8] sm:$0xff]
        %v365 = vld [vmem:[%s184 + $0x3f0] sm:$0xff]
        %v366 = vld [vmem:[%s184 + $0x3f8] sm:$0xff]
        %v367 = vld [vmem:[%s194] sm:$0xff]
        %v368 = vld [vmem:[%s194 + $0x8] sm:$0xff]
        %v369 = vld [vmem:[%s194 + $0x10] sm:$0xff]
        %v370 = vld [vmem:[%s194 + $0x18] sm:$0xff]
        %v371 = vld [vmem:[%s194 + $0x20] sm:$0xff]
        %v372 = vld [vmem:[%s194 + $0x28] sm:$0xff]
        %v373 = vld [vmem:[%s194 + $0x30] sm:$0xff]
        %v374 = vld [vmem:[%s194 + $0x38] sm:$0xff]
        %v375 = vld [vmem:[%s194 + $0x40] sm:$0xff]
        %v376 = vld [vmem:[%s194 + $0x48] sm:$0xff]
        %v377 = vld [vmem:[%s194 + $0x50] sm:$0xff]
        %v378 = vld [vmem:[%s194 + $0x58] sm:$0xff]
        %v379 = vld [vmem:[%s194 + $0x60] sm:$0xff]
        %v380 = vld [vmem:[%s194 + $0x68] sm:$0xff]
        %v381 = vld [vmem:[%s194 + $0x70] sm:$0xff]
        %v382 = vld [vmem:[%s194 + $0x78] sm:$0xff]
        %v383 = vld [vmem:[%s194 + $0x80] sm:$0xff]
        %v384 = vld [vmem:[%s194 + $0x88] sm:$0xff]
        %v385 = vld [vmem:[%s194 + $0x90] sm:$0xff]
        %v386 = vld [vmem:[%s194 + $0x98] sm:$0xff]
        %v387 = vld [vmem:[%s194 + $0xa0] sm:$0xff]
        %v388 = vld [vmem:[%s194 + $0xa8] sm:$0xff]
        %v389 = vld [vmem:[%s194 + $0xb0] sm:$0xff]
        %v390 = vld [vmem:[%s194 + $0xb8] sm:$0xff]
        %v391 = vld [vmem:[%s194 + $0xc0] sm:$0xff]
        %v392 = vld [vmem:[%s194 + $0xc8] sm:$0xff]
        %v393 = vld [vmem:[%s194 + $0xd0] sm:$0xff]
        %v394 = vld [vmem:[%s194 + $0xd8] sm:$0xff]
        %v395 = vld [vmem:[%s194 + $0xe0] sm:$0xff]
        %v396 = vld [vmem:[%s194 + $0xe8] sm:$0xff]
        %v397 = vld [vmem:[%s194 + $0xf0] sm:$0xff]
        %v398 = vld [vmem:[%s194 + $0xf8] sm:$0xff]
        %v399 = vld [vmem:[%s194 + $0x100] sm:$0xff]
        %v400 = vld [vmem:[%s194 + $0x108] sm:$0xff]
        %v401 = vld [vmem:[%s194 + $0x110] sm:$0xff]
        %v402 = vld [vmem:[%s194 + $0x118] sm:$0xff]
        %v403 = vld [vmem:[%s194 + $0x120] sm:$0xff]
        %v404 = vld [vmem:[%s194 + $0x128] sm:$0xff]
        %v405 = vld [vmem:[%s194 + $0x130] sm:$0xff]
        %v406 = vld [vmem:[%s194 + $0x138] sm:$0xff]
        %v407 = vld [vmem:[%s194 + $0x140] sm:$0xff]
        %v408 = vld [vmem:[%s194 + $0x148] sm:$0xff]
        %v409 = vld [vmem:[%s194 + $0x150] sm:$0xff]
        %v410 = vld [vmem:[%s194 + $0x158] sm:$0xff]
        %v411 = vld [vmem:[%s194 + $0x160] sm:$0xff]
        %v412 = vld [vmem:[%s194 + $0x168] sm:$0xff]
        %v413 = vld [vmem:[%s194 + $0x170] sm:$0xff]
        %v414 = vld [vmem:[%s194 + $0x178] sm:$0xff]
        %v415 = vld [vmem:[%s194 + $0x180] sm:$0xff]
        %v416 = vld [vmem:[%s194 + $0x188] sm:$0xff]
        %v417 = vld [vmem:[%s194 + $0x190] sm:$0xff]
        %v418 = vld [vmem:[%s194 + $0x198] sm:$0xff]
        %v419 = vld [vmem:[%s194 + $0x1a0] sm:$0xff]
        %v420 = vld [vmem:[%s194 + $0x1a8] sm:$0xff]
        %v421 = vld [vmem:[%s194 + $0x1b0] sm:$0xff]
        %v422 = vld [vmem:[%s194 + $0x1b8] sm:$0xff]
        %v423 = vld [vmem:[%s194 + $0x1c0] sm:$0xff]
        %v424 = vld [vmem:[%s194 + $0x1c8] sm:$0xff]
        %v425 = vld [vmem:[%s194 + $0x1d0] sm:$0xff]
        %v426 = vld [vmem:[%s194 + $0x1d8] sm:$0xff]
        %v427 = vld [vmem:[%s194 + $0x1e0] sm:$0xff]
        %v428 = vld [vmem:[%s194 + $0x1e8] sm:$0xff]
        %v429 = vld [vmem:[%s194 + $0x1f0] sm:$0xff]
        %v430 = vld [vmem:[%s194 + $0x1f8] sm:$0xff]
        %v431 = vld [vmem:[%s194 + $0x200] sm:$0xff]
        %v432 = vld [vmem:[%s194 + $0x208] sm:$0xff]
        %v433 = vld [vmem:[%s194 + $0x210] sm:$0xff]
        %v434 = vld [vmem:[%s194 + $0x218] sm:$0xff]
        %v435 = vld [vmem:[%s194 + $0x220] sm:$0xff]
        %v436 = vld [vmem:[%s194 + $0x228] sm:$0xff]
        %v437 = vld [vmem:[%s194 + $0x230] sm:$0xff]
        %v438 = vld [vmem:[%s194 + $0x238] sm:$0xff]
        %v439 = vld [vmem:[%s194 + $0x240] sm:$0xff]
        %v440 = vld [vmem:[%s194 + $0x248] sm:$0xff]
        %v441 = vld [vmem:[%s194 + $0x250] sm:$0xff]
        %v442 = vld [vmem:[%s194 + $0x258] sm:$0xff]
        %v443 = vld [vmem:[%s194 + $0x260] sm:$0xff]
        %v444 = vld [vmem:[%s194 + $0x268] sm:$0xff]
        %v445 = vld [vmem:[%s194 + $0x270] sm:$0xff]
        %v446 = vld [vmem:[%s194 + $0x278] sm:$0xff]
        %v447 = vld [vmem:[%s194 + $0x280] sm:$0xff]
        %v448 = vld [vmem:[%s194 + $0x288] sm:$0xff]
        %v449 = vld [vmem:[%s194 + $0x290] sm:$0xff]
        %v450 = vld [vmem:[%s194 + $0x298] sm:$0xff]
        %v451 = vld [vmem:[%s194 + $0x2a0] sm:$0xff]
        %v452 = vld [vmem:[%s194 + $0x2a8] sm:$0xff]
        %v453 = vld [vmem:[%s194 + $0x2b0] sm:$0xff]
        %v454 = vld [vmem:[%s194 + $0x2b8] sm:$0xff]
        %v455 = vld [vmem:[%s194 + $0x2c0] sm:$0xff]
        %v456 = vld [vmem:[%s194 + $0x2c8] sm:$0xff]
        %v457 = vld [vmem:[%s194 + $0x2d0] sm:$0xff]
        %v458 = vld [vmem:[%s194 + $0x2d8] sm:$0xff]
        %v459 = vld [vmem:[%s194 + $0x2e0] sm:$0xff]
        %v460 = vld [vmem:[%s194 + $0x2e8] sm:$0xff]
        %v461 = vld [vmem:[%s194 + $0x2f0] sm:$0xff]
        %v462 = vld [vmem:[%s194 + $0x2f8] sm:$0xff]
        %v463 = vld [vmem:[%s194 + $0x300] sm:$0xff]
        %v464 = vld [vmem:[%s194 + $0x308] sm:$0xff]
        %v465 = vld [vmem:[%s194 + $0x310] sm:$0xff]
        %v466 = vld [vmem:[%s194 + $0x318] sm:$0xff]
        %v467 = vld [vmem:[%s194 + $0x320] sm:$0xff]
        %v468 = vld [vmem:[%s194 + $0x328] sm:$0xff]
        %v469 = vld [vmem:[%s194 + $0x330] sm:$0xff]
        %v470 = vld [vmem:[%s194 + $0x338] sm:$0xff]
        %v471 = vld [vmem:[%s194 + $0x340] sm:$0xff]
        %v472 = vld [vmem:[%s194 + $0x348] sm:$0xff]
        %v473 = vld [vmem:[%s194 + $0x350] sm:$0xff]
        %v474 = vld [vmem:[%s194 + $0x358] sm:$0xff]
        %v475 = vld [vmem:[%s194 + $0x360] sm:$0xff]
        %v476 = vld [vmem:[%s194 + $0x368] sm:$0xff]
        %v477 = vld [vmem:[%s194 + $0x370] sm:$0xff]
        %v478 = vld [vmem:[%s194 + $0x378] sm:$0xff]
        %v479 = vld [vmem:[%s194 + $0x380] sm:$0xff]
        %v480 = vld [vmem:[%s194 + $0x388] sm:$0xff]
        %v481 = vld [vmem:[%s194 + $0x390] sm:$0xff]
        %v482 = vld [vmem:[%s194 + $0x398] sm:$0xff]
        %v483 = vld [vmem:[%s194 + $0x3a0] sm:$0xff]
        %v484 = vld [vmem:[%s194 + $0x3a8] sm:$0xff]
        %v485 = vld [vmem:[%s194 + $0x3b0] sm:$0xff]
        %v486 = vld [vmem:[%s194 + $0x3b8] sm:$0xff]
        %v487 = vld [vmem:[%s194 + $0x3c0] sm:$0xff]
        %v488 = vld [vmem:[%s194 + $0x3c8] sm:$0xff]
        %v489 = vld [vmem:[%s194 + $0x3d0] sm:$0xff]
        %v490 = vld [vmem:[%s194 + $0x3d8] sm:$0xff]
        %v491 = vld [vmem:[%s194 + $0x3e0] sm:$0xff]
        %v492 = vld [vmem:[%s194 + $0x3e8] sm:$0xff]
        %v493 = vld [vmem:[%s194 + $0x3f0] sm:$0xff]
        %v494 = vld [vmem:[%s194 + $0x3f8] sm:$0xff]
        %v495 = vmax.f32 %v239, %v240
        %v496 = vmax.f32 %v495, %v241
        %v497 = vmax.f32 %v496, %v242
        %498 = vmax.xlane.f32.xlu0 %v497
        %v499 = vpop.xlane.xlu0 %498
        %v500 = vmax.f32 %v243, %v244
        %v501 = vmax.f32 %v500, %v245
        %v502 = vmax.f32 %v501, %v246
        %503 = vmax.xlane.f32.xlu0 %v502
        %v504 = vpop.xlane.xlu0 %503
        %v505 = vmax.f32 %v247, %v248
        %v506 = vmax.f32 %v505, %v249
        %v507 = vmax.f32 %v506, %v250
        %508 = vmax.xlane.f32.xlu0 %v507
        %v509 = vpop.xlane.xlu0 %508
        %v510 = vmax.f32 %v251, %v252
        %v511 = vmax.f32 %v510, %v253
        %v512 = vmax.f32 %v511, %v254
        %513 = vmax.xlane.f32.xlu0 %v512
        %v514 = vpop.xlane.xlu0 %513
        %v515 = vmax.f32 %v255, %v256
        %v516 = vmax.f32 %v515, %v257
        %v517 = vmax.f32 %v516, %v258
        %518 = vmax.xlane.f32.xlu0 %v517
        %v519 = vpop.xlane.xlu0 %518
        %v520 = vmax.f32 %v259, %v260
        %v521 = vmax.f32 %v520, %v261
        %v522 = vmax.f32 %v521, %v262
        %523 = vmax.xlane.f32.xlu0 %v522
        %v524 = vpop.xlane.xlu0 %523
        %v525 = vmax.f32 %v263, %v264
        %v526 = vmax.f32 %v525, %v265
        %v527 = vmax.f32 %v526, %v266
        %528 = vmax.xlane.f32.xlu0 %v527
        %v529 = vpop.xlane.xlu0 %528
        %v530 = vmax.f32 %v267, %v268
        %v531 = vmax.f32 %v530, %v269
        %v532 = vmax.f32 %v531, %v270
        %533 = vmax.xlane.f32.xlu0 %v532
        %v534 = vpop.xlane.xlu0 %533
        %v535 = vmax.f32 %v271, %v272
        %v536 = vmax.f32 %v535, %v273
        %v537 = vmax.f32 %v536, %v274
        %538 = vmax.xlane.f32.xlu0 %v537
        %v539 = vpop.xlane.xlu0 %538
        %v540 = vmax.f32 %v275, %v276
        %v541 = vmax.f32 %v540, %v277
        %v542 = vmax.f32 %v541, %v278
        %543 = vmax.xlane.f32.xlu0 %v542
        %v544 = vpop.xlane.xlu0 %543
        %v545 = vmax.f32 %v279, %v280
        %v546 = vmax.f32 %v545, %v281
        %v547 = vmax.f32 %v546, %v282
        %548 = vmax.xlane.f32.xlu0 %v547
        %v549 = vpop.xlane.xlu0 %548
        %v550 = vmax.f32 %v283, %v284
        %v551 = vmax.f32 %v550, %v285
        %v552 = vmax.f32 %v551, %v286
        %553 = vmax.xlane.f32.xlu0 %v552
        %v554 = vpop.xlane.xlu0 %553
        %v555 = vmax.f32 %v287, %v288
        %v556 = vmax.f32 %v555, %v289
        %v557 = vmax.f32 %v556, %v290
        %558 = vmax.xlane.f32.xlu0 %v557
        %v559 = vpop.xlane.xlu0 %558
        %v560 = vmax.f32 %v291, %v292
        %v561 = vmax.f32 %v560, %v293
        %v562 = vmax.f32 %v561, %v294
        %563 = vmax.xlane.f32.xlu0 %v562
        %v564 = vpop.xlane.xlu0 %563
        %v565 = vmax.f32 %v295, %v296
        %v566 = vmax.f32 %v565, %v297
        %v567 = vmax.f32 %v566, %v298
        %568 = vmax.xlane.f32.xlu0 %v567
        %v569 = vpop.xlane.xlu0 %568
        %v570 = vmax.f32 %v299, %v300
        %v571 = vmax.f32 %v570, %v301
        %v572 = vmax.f32 %v571, %v302
        %573 = vmax.xlane.f32.xlu0 %v572
        %v574 = vpop.xlane.xlu0 %573
        %v575 = vmax.f32 %v303, %v304
        %v576 = vmax.f32 %v575, %v305
        %v577 = vmax.f32 %v576, %v306
        %578 = vmax.xlane.f32.xlu0 %v577
        %v579 = vpop.xlane.xlu0 %578
        %v580 = vmax.f32 %v307, %v308
        %v581 = vmax.f32 %v580, %v309
        %v582 = vmax.f32 %v581, %v310
        %583 = vmax.xlane.f32.xlu0 %v582
        %v584 = vpop.xlane.xlu0 %583
        %v585 = vmax.f32 %v311, %v312
        %v586 = vmax.f32 %v585, %v313
        %v587 = vmax.f32 %v586, %v314
        %588 = vmax.xlane.f32.xlu0 %v587
        %v589 = vpop.xlane.xlu0 %588
        %v590 = vmax.f32 %v315, %v316
        %v591 = vmax.f32 %v590, %v317
        %v592 = vmax.f32 %v591, %v318
        %593 = vmax.xlane.f32.xlu0 %v592
        %v594 = vpop.xlane.xlu0 %593
        %v595 = vmax.f32 %v319, %v320
        %v596 = vmax.f32 %v595, %v321
        %v597 = vmax.f32 %v596, %v322
        %598 = vmax.xlane.f32.xlu0 %v597
        %v599 = vpop.xlane.xlu0 %598
        %v600 = vmax.f32 %v323, %v324
        %v601 = vmax.f32 %v600, %v325
        %v602 = vmax.f32 %v601, %v326
        %603 = vmax.xlane.f32.xlu0 %v602
        %v604 = vpop.xlane.xlu0 %603
        %v605 = vmax.f32 %v327, %v328
        %v606 = vmax.f32 %v605, %v329
        %v607 = vmax.f32 %v606, %v330
        %608 = vmax.xlane.f32.xlu0 %v607
        %v609 = vpop.xlane.xlu0 %608
        %v610 = vmax.f32 %v331, %v332
        %v611 = vmax.f32 %v610, %v333
        %v612 = vmax.f32 %v611, %v334
        %613 = vmax.xlane.f32.xlu0 %v612
        %v614 = vpop.xlane.xlu0 %613
        %v615 = vmax.f32 %v335, %v336
        %v616 = vmax.f32 %v615, %v337
        %v617 = vmax.f32 %v616, %v338
        %618 = vmax.xlane.f32.xlu0 %v617
        %v619 = vpop.xlane.xlu0 %618
        %v620 = vmax.f32 %v339, %v340
        %v621 = vmax.f32 %v620, %v341
        %v622 = vmax.f32 %v621, %v342
        %623 = vmax.xlane.f32.xlu0 %v622
        %v624 = vpop.xlane.xlu0 %623
        %v625 = vmax.f32 %v343, %v344
        %v626 = vmax.f32 %v625, %v345
        %v627 = vmax.f32 %v626, %v346
        %628 = vmax.xlane.f32.xlu0 %v627
        %v629 = vpop.xlane.xlu0 %628
        %v630 = vmax.f32 %v347, %v348
        %v631 = vmax.f32 %v630, %v349
        %v632 = vmax.f32 %v631, %v350
        %633 = vmax.xlane.f32.xlu0 %v632
        %v634 = vpop.xlane.xlu0 %633
        %v635 = vmax.f32 %v351, %v352
        %v636 = vmax.f32 %v635, %v353
        %v637 = vmax.f32 %v636, %v354
        %638 = vmax.xlane.f32.xlu0 %v637
        %v639 = vpop.xlane.xlu0 %638
        %v640 = vmax.f32 %v355, %v356
        %v641 = vmax.f32 %v640, %v357
        %v642 = vmax.f32 %v641, %v358
        %643 = vmax.xlane.f32.xlu0 %v642
        %v644 = vpop.xlane.xlu0 %643
        %v645 = vmax.f32 %v359, %v360
        %v646 = vmax.f32 %v645, %v361
        %v647 = vmax.f32 %v646, %v362
        %648 = vmax.xlane.f32.xlu0 %v647
        %v649 = vpop.xlane.xlu0 %648
        %v650 = vmax.f32 %v363, %v364
        %v651 = vmax.f32 %v650, %v365
        %v652 = vmax.f32 %v651, %v366
        %653 = vmax.xlane.f32.xlu0 %v652
        %v654 = vpop.xlane.xlu0 %653
        %v655 = vsub.f32 %v239, %v499
        %v656 = vsub.f32 %v240, %v499
        %v657 = vsub.f32 %v241, %v499
        %v658 = vsub.f32 %v242, %v499
        %v659 = vsub.f32 %v243, %v504
        %v660 = vsub.f32 %v244, %v504
        %v661 = vsub.f32 %v245, %v504
        %v662 = vsub.f32 %v246, %v504
        %v663 = vsub.f32 %v247, %v509
        %v664 = vsub.f32 %v248, %v509
        %v665 = vsub.f32 %v249, %v509
        %v666 = vsub.f32 %v250, %v509
        %v667 = vsub.f32 %v251, %v514
        %v668 = vsub.f32 %v252, %v514
        %v669 = vsub.f32 %v253, %v514
        %v670 = vsub.f32 %v254, %v514
        %v671 = vsub.f32 %v255, %v519
        %v672 = vsub.f32 %v256, %v519
        %v673 = vsub.f32 %v257, %v519
        %v674 = vsub.f32 %v258, %v519
        %v675 = vsub.f32 %v259, %v524
        %v676 = vsub.f32 %v260, %v524
        %v677 = vsub.f32 %v261, %v524
        %v678 = vsub.f32 %v262, %v524
        %v679 = vsub.f32 %v263, %v529
        %v680 = vsub.f32 %v264, %v529
        %v681 = vsub.f32 %v265, %v529
        %v682 = vsub.f32 %v266, %v529
        %v683 = vsub.f32 %v267, %v534
        %v684 = vsub.f32 %v268, %v534
        %v685 = vsub.f32 %v269, %v534
        %v686 = vsub.f32 %v270, %v534
        %v687 = vsub.f32 %v271, %v539
        %v688 = vsub.f32 %v272, %v539
        %v689 = vsub.f32 %v273, %v539
        %v690 = vsub.f32 %v274, %v539
        %v691 = vsub.f32 %v275, %v544
        %v692 = vsub.f32 %v276, %v544
        %v693 = vsub.f32 %v277, %v544
        %v694 = vsub.f32 %v278, %v544
        %v695 = vsub.f32 %v279, %v549
        %v696 = vsub.f32 %v280, %v549
        %v697 = vsub.f32 %v281, %v549
        %v698 = vsub.f32 %v282, %v549
        %v699 = vsub.f32 %v283, %v554
        %v700 = vsub.f32 %v284, %v554
        %v701 = vsub.f32 %v285, %v554
        %v702 = vsub.f32 %v286, %v554
        %v703 = vsub.f32 %v287, %v559
        %v704 = vsub.f32 %v288, %v559
        %v705 = vsub.f32 %v289, %v559
        %v706 = vsub.f32 %v290, %v559
        %v707 = vsub.f32 %v291, %v564
        %v708 = vsub.f32 %v292, %v564
        %v709 = vsub.f32 %v293, %v564
        %v710 = vsub.f32 %v294, %v564
        %v711 = vsub.f32 %v295, %v569
        %v712 = vsub.f32 %v296, %v569
        %v713 = vsub.f32 %v297, %v569
        %v714 = vsub.f32 %v298, %v569
        %v715 = vsub.f32 %v299, %v574
        %v716 = vsub.f32 %v300, %v574
        %v717 = vsub.f32 %v301, %v574
        %v718 = vsub.f32 %v302, %v574
        %v719 = vsub.f32 %v303, %v579
        %v720 = vsub.f32 %v304, %v579
        %v721 = vsub.f32 %v305, %v579
        %v722 = vsub.f32 %v306, %v579
        %v723 = vsub.f32 %v307, %v584
        %v724 = vsub.f32 %v308, %v584
        %v725 = vsub.f32 %v309, %v584
        %v726 = vsub.f32 %v310, %v584
        %v727 = vsub.f32 %v311, %v589
        %v728 = vsub.f32 %v312, %v589
        %v729 = vsub.f32 %v313, %v589
        %v730 = vsub.f32 %v314, %v589
        %v731 = vsub.f32 %v315, %v594
        %v732 = vsub.f32 %v316, %v594
        %v733 = vsub.f32 %v317, %v594
        %v734 = vsub.f32 %v318, %v594
        %v735 = vsub.f32 %v319, %v599
        %v736 = vsub.f32 %v320, %v599
        %v737 = vsub.f32 %v321, %v599
        %v738 = vsub.f32 %v322, %v599
        %v739 = vsub.f32 %v323, %v604
        %v740 = vsub.f32 %v324, %v604
        %v741 = vsub.f32 %v325, %v604
        %v742 = vsub.f32 %v326, %v604
        %v743 = vsub.f32 %v327, %v609
        %v744 = vsub.f32 %v328, %v609
        %v745 = vsub.f32 %v329, %v609
        %v746 = vsub.f32 %v330, %v609
        %v747 = vsub.f32 %v331, %v614
        %v748 = vsub.f32 %v332, %v614
        %v749 = vsub.f32 %v333, %v614
        %v750 = vsub.f32 %v334, %v614
        %v751 = vsub.f32 %v335, %v619
        %v752 = vsub.f32 %v336, %v619
        %v753 = vsub.f32 %v337, %v619
        %v754 = vsub.f32 %v338, %v619
        %v755 = vsub.f32 %v339, %v624
        %v756 = vsub.f32 %v340, %v624
        %v757 = vsub.f32 %v341, %v624
        %v758 = vsub.f32 %v342, %v624
        %v759 = vsub.f32 %v343, %v629
        %v760 = vsub.f32 %v344, %v629
        %v761 = vsub.f32 %v345, %v629
        %v762 = vsub.f32 %v346, %v629
        %v763 = vsub.f32 %v347, %v634
        %v764 = vsub.f32 %v348, %v634
        %v765 = vsub.f32 %v349, %v634
        %v766 = vsub.f32 %v350, %v634
        %v767 = vsub.f32 %v351, %v639
        %v768 = vsub.f32 %v352, %v639
        %v769 = vsub.f32 %v353, %v639
        %v770 = vsub.f32 %v354, %v639
        %v771 = vsub.f32 %v355, %v644
        %v772 = vsub.f32 %v356, %v644
        %v773 = vsub.f32 %v357, %v644
        %v774 = vsub.f32 %v358, %v644
        %v775 = vsub.f32 %v359, %v649
        %v776 = vsub.f32 %v360, %v649
        %v777 = vsub.f32 %v361, %v649
        %v778 = vsub.f32 %v362, %v649
        %v779 = vsub.f32 %v363, %v654
        %v780 = vsub.f32 %v364, %v654
        %v781 = vsub.f32 %v365, %v654
        %v782 = vsub.f32 %v366, %v654
        %v783 = vmul.f32 %v655, 1.442695
        %v784 = vpow.pop %v783
        %v785 = vmul.f32 %v656, 1.442695
        %v786 = vpow.pop %v785
        %v787 = vmul.f32 %v657, 1.442695
        %v788 = vpow.pop %v787
        %v789 = vmul.f32 %v658, 1.442695
        %v790 = vpow.pop %v789
        %v791 = vmul.f32 %v659, 1.442695
        %v792 = vpow.pop %v791
        %v793 = vmul.f32 %v660, 1.442695
        %v794 = vpow.pop %v793
        %v795 = vmul.f32 %v661, 1.442695
        %v796 = vpow.pop %v795
        %v797 = vmul.f32 %v662, 1.442695
        %v798 = vpow.pop %v797
        %v799 = vmul.f32 %v663, 1.442695
        %v800 = vpow.pop %v799
        %v801 = vmul.f32 %v664, 1.442695
        %v802 = vpow.pop %v801
        %v803 = vmul.f32 %v665, 1.442695
        %v804 = vpow.pop %v803
        %v805 = vmul.f32 %v666, 1.442695
        %v806 = vpow.pop %v805
        %v807 = vmul.f32 %v667, 1.442695
        %v808 = vpow.pop %v807
        %v809 = vmul.f32 %v668, 1.442695
        %v810 = vpow.pop %v809
        %v811 = vmul.f32 %v669, 1.442695
        %v812 = vpow.pop %v811
        %v813 = vmul.f32 %v670, 1.442695
        %v814 = vpow.pop %v813
        %v815 = vmul.f32 %v671, 1.442695
        %v816 = vpow.pop %v815
        %v817 = vmul.f32 %v672, 1.442695
        %v818 = vpow.pop %v817
        %v819 = vmul.f32 %v673, 1.442695
        %v820 = vpow.pop %v819
        %v821 = vmul.f32 %v674, 1.442695
        %v822 = vpow.pop %v821
        %v823 = vmul.f32 %v675, 1.442695
        %v824 = vpow.pop %v823
        %v825 = vmul.f32 %v676, 1.442695
        %v826 = vpow.pop %v825
        %v827 = vmul.f32 %v677, 1.442695
        %v828 = vpow.pop %v827
        %v829 = vmul.f32 %v678, 1.442695
        %v830 = vpow.pop %v829
        %v831 = vmul.f32 %v679, 1.442695
        %v832 = vpow.pop %v831
        %v833 = vmul.f32 %v680, 1.442695
        %v834 = vpow.pop %v833
        %v835 = vmul.f32 %v681, 1.442695
        %v836 = vpow.pop %v835
        %v837 = vmul.f32 %v682, 1.442695
        %v838 = vpow.pop %v837
        %v839 = vmul.f32 %v683, 1.442695
        %v840 = vpow.pop %v839
        %v841 = vmul.f32 %v684, 1.442695
        %v842 = vpow.pop %v841
        %v843 = vmul.f32 %v685, 1.442695
        %v844 = vpow.pop %v843
        %v845 = vmul.f32 %v686, 1.442695
        %v846 = vpow.pop %v845
        %v847 = vmul.f32 %v687, 1.442695
        %v848 = vpow.pop %v847
        %v849 = vmul.f32 %v688, 1.442695
        %v850 = vpow.pop %v849
        %v851 = vmul.f32 %v689, 1.442695
        %v852 = vpow.pop %v851
        %v853 = vmul.f32 %v690, 1.442695
        %v854 = vpow.pop %v853
        %v855 = vmul.f32 %v691, 1.442695
        %v856 = vpow.pop %v855
        %v857 = vmul.f32 %v692, 1.442695
        %v858 = vpow.pop %v857
        %v859 = vmul.f32 %v693, 1.442695
        %v860 = vpow.pop %v859
        %v861 = vmul.f32 %v694, 1.442695
        %v862 = vpow.pop %v861
        %v863 = vmul.f32 %v695, 1.442695
        %v864 = vpow.pop %v863
        %v865 = vmul.f32 %v696, 1.442695
        %v866 = vpow.pop %v865
        %v867 = vmul.f32 %v697, 1.442695
        %v868 = vpow.pop %v867
        %v869 = vmul.f32 %v698, 1.442695
        %v870 = vpow.pop %v869
        %v871 = vmul.f32 %v699, 1.442695
        %v872 = vpow.pop %v871
        %v873 = vmul.f32 %v700, 1.442695
        %v874 = vpow.pop %v873
        %v875 = vmul.f32 %v701, 1.442695
        %v876 = vpow.pop %v875
        %v877 = vmul.f32 %v702, 1.442695
        %v878 = vpow.pop %v877
        %v879 = vmul.f32 %v703, 1.442695
        %v880 = vpow.pop %v879
        %v881 = vmul.f32 %v704, 1.442695
        %v882 = vpow.pop %v881
        %v883 = vmul.f32 %v705, 1.442695
        %v884 = vpow.pop %v883
        %v885 = vmul.f32 %v706, 1.442695
        %v886 = vpow.pop %v885
        %v887 = vmul.f32 %v707, 1.442695
        %v888 = vpow.pop %v887
        %v889 = vmul.f32 %v708, 1.442695
        %v890 = vpow.pop %v889
        %v891 = vmul.f32 %v709, 1.442695
        %v892 = vpow.pop %v891
        %v893 = vmul.f32 %v710, 1.442695
        %v894 = vpow.pop %v893
        %v895 = vmul.f32 %v711, 1.442695
        %v896 = vpow.pop %v895
        %v897 = vmul.f32 %v712, 1.442695
        %v898 = vpow.pop %v897
        %v899 = vmul.f32 %v713, 1.442695
        %v900 = vpow.pop %v899
        %v901 = vmul.f32 %v714, 1.442695
        %v902 = vpow.pop %v901
        %v903 = vmul.f32 %v715, 1.442695
        %v904 = vpow.pop %v903
        %v905 = vmul.f32 %v716, 1.442695
        %v906 = vpow.pop %v905
        %v907 = vmul.f32 %v717, 1.442695
        %v908 = vpow.pop %v907
        %v909 = vmul.f32 %v718, 1.442695
        %v910 = vpow.pop %v909
        %v911 = vmul.f32 %v719, 1.442695
        %v912 = vpow.pop %v911
        %v913 = vmul.f32 %v720, 1.442695
        %v914 = vpow.pop %v913
        %v915 = vmul.f32 %v721, 1.442695
        %v916 = vpow.pop %v915
        %v917 = vmul.f32 %v722, 1.442695
        %v918 = vpow.pop %v917
        %v919 = vmul.f32 %v723, 1.442695
        %v920 = vpow.pop %v919
        %v921 = vmul.f32 %v724, 1.442695
        %v922 = vpow.pop %v921
        %v923 = vmul.f32 %v725, 1.442695
        %v924 = vpow.pop %v923
        %v925 = vmul.f32 %v726, 1.442695
        %v926 = vpow.pop %v925
        %v927 = vmul.f32 %v727, 1.442695
        %v928 = vpow.pop %v927
        %v929 = vmul.f32 %v728, 1.442695
        %v930 = vpow.pop %v929
        %v931 = vmul.f32 %v729, 1.442695
        %v932 = vpow.pop %v931
        %v933 = vmul.f32 %v730, 1.442695
        %v934 = vpow.pop %v933
        %v935 = vmul.f32 %v731, 1.442695
        %v936 = vpow.pop %v935
        %v937 = vmul.f32 %v732, 1.442695
        %v938 = vpow.pop %v937
        %v939 = vmul.f32 %v733, 1.442695
        %v940 = vpow.pop %v939
        %v941 = vmul.f32 %v734, 1.442695
        %v942 = vpow.pop %v941
        %v943 = vmul.f32 %v735, 1.442695
        %v944 = vpow.pop %v943
        %v945 = vmul.f32 %v736, 1.442695
        %v946 = vpow.pop %v945
        %v947 = vmul.f32 %v737, 1.442695
        %v948 = vpow.pop %v947
        %v949 = vmul.f32 %v738, 1.442695
        %v950 = vpow.pop %v949
        %v951 = vmul.f32 %v739, 1.442695
        %v952 = vpow.pop %v951
        %v953 = vmul.f32 %v740, 1.442695
        %v954 = vpow.pop %v953
        %v955 = vmul.f32 %v741, 1.442695
        %v956 = vpow.pop %v955
        %v957 = vmul.f32 %v742, 1.442695
        %v958 = vpow.pop %v957
        %v959 = vmul.f32 %v743, 1.442695
        %v960 = vpow.pop %v959
        %v961 = vmul.f32 %v744, 1.442695
        %v962 = vpow.pop %v961
        %v963 = vmul.f32 %v745, 1.442695
        %v964 = vpow.pop %v963
        %v965 = vmul.f32 %v746, 1.442695
        %v966 = vpow.pop %v965
        %v967 = vmul.f32 %v747, 1.442695
        %v968 = vpow.pop %v967
        %v969 = vmul.f32 %v748, 1.442695
        %v970 = vpow.pop %v969
        %v971 = vmul.f32 %v749, 1.442695
        %v972 = vpow.pop %v971
        %v973 = vmul.f32 %v750, 1.442695
        %v974 = vpow.pop %v973
        %v975 = vmul.f32 %v751, 1.442695
        %v976 = vpow.pop %v975
        %v977 = vmul.f32 %v752, 1.442695
        %v978 = vpow.pop %v977
        %v979 = vmul.f32 %v753, 1.442695
        %v980 = vpow.pop %v979
        %v981 = vmul.f32 %v754, 1.442695
        %v982 = vpow.pop %v981
        %v983 = vmul.f32 %v755, 1.442695
        %v984 = vpow.pop %v983
        %v985 = vmul.f32 %v756, 1.442695
        %v986 = vpow.pop %v985
        %v987 = vmul.f32 %v757, 1.442695
        %v988 = vpow.pop %v987
        %v989 = vmul.f32 %v758, 1.442695
        %v990 = vpow.pop %v989
        %v991 = vmul.f32 %v759, 1.442695
        %v992 = vpow.pop %v991
        %v993 = vmul.f32 %v760, 1.442695
        %v994 = vpow.pop %v993
        %v995 = vmul.f32 %v761, 1.442695
        %v996 = vpow.pop %v995
        %v997 = vmul.f32 %v762, 1.442695
        %v998 = vpow.pop %v997
        %v999 = vmul.f32 %v763, 1.442695
        %v1000 = vpow.pop %v999
        %v1001 = vmul.f32 %v764, 1.442695
        %v1002 = vpow.pop %v1001
        %v1003 = vmul.f32 %v765, 1.442695
        %v1004 = vpow.pop %v1003
        %v1005 = vmul.f32 %v766, 1.442695
        %v1006 = vpow.pop %v1005
        %v1007 = vmul.f32 %v767, 1.442695
        %v1008 = vpow.pop %v1007
        %v1009 = vmul.f32 %v768, 1.442695
        %v1010 = vpow.pop %v1009
        %v1011 = vmul.f32 %v769, 1.442695
        %v1012 = vpow.pop %v1011
        %v1013 = vmul.f32 %v770, 1.442695
        %v1014 = vpow.pop %v1013
        %v1015 = vmul.f32 %v771, 1.442695
        %v1016 = vpow.pop %v1015
        %v1017 = vmul.f32 %v772, 1.442695
        %v1018 = vpow.pop %v1017
        %v1019 = vmul.f32 %v773, 1.442695
        %v1020 = vpow.pop %v1019
        %v1021 = vmul.f32 %v774, 1.442695
        %v1022 = vpow.pop %v1021
        %v1023 = vmul.f32 %v775, 1.442695
        %v1024 = vpow.pop %v1023
        %v1025 = vmul.f32 %v776, 1.442695
        %v1026 = vpow.pop %v1025
        %v1027 = vmul.f32 %v777, 1.442695
        %v1028 = vpow.pop %v1027
        %v1029 = vmul.f32 %v778, 1.442695
        %v1030 = vpow.pop %v1029
        %v1031 = vmul.f32 %v779, 1.442695
        %v1032 = vpow.pop %v1031
        %v1033 = vmul.f32 %v780, 1.442695
        %v1034 = vpow.pop %v1033
        %v1035 = vmul.f32 %v781, 1.442695
        %v1036 = vpow.pop %v1035
        %v1037 = vmul.f32 %v782, 1.442695
        %v1038 = vpow.pop %v1037
        %v1039 = vadd.f32 %v784, %v786
        %v1040 = vadd.f32 %v1039, %v788
        %v1041 = vadd.f32 %v1040, %v790
        %1042 = vadd.xlane.f32.xlu0 %v1041
        %v1043 = vpop.xlane.xlu0 %1042
        %v1044 = vadd.f32 %v792, %v794
        %v1045 = vadd.f32 %v1044, %v796
        %v1046 = vadd.f32 %v1045, %v798
        %1047 = vadd.xlane.f32.xlu0 %v1046
        %v1048 = vpop.xlane.xlu0 %1047
        %v1049 = vadd.f32 %v800, %v802
        %v1050 = vadd.f32 %v1049, %v804
        %v1051 = vadd.f32 %v1050, %v806
        %1052 = vadd.xlane.f32.xlu0 %v1051
        %v1053 = vpop.xlane.xlu0 %1052
        %v1054 = vadd.f32 %v808, %v810
        %v1055 = vadd.f32 %v1054, %v812
        %v1056 = vadd.f32 %v1055, %v814
        %1057 = vadd.xlane.f32.xlu0 %v1056
        %v1058 = vpop.xlane.xlu0 %1057
        %v1059 = vadd.f32 %v816, %v818
        %v1060 = vadd.f32 %v1059, %v820
        %v1061 = vadd.f32 %v1060, %v822
        %1062 = vadd.xlane.f32.xlu0 %v1061
        %v1063 = vpop.xlane.xlu0 %1062
        %v1064 = vadd.f32 %v824, %v826
        %v1065 = vadd.f32 %v1064, %v828
        %v1066 = vadd.f32 %v1065, %v830
        %1067 = vadd.xlane.f32.xlu0 %v1066
        %v1068 = vpop.xlane.xlu0 %1067
        %v1069 = vadd.f32 %v832, %v834
        %v1070 = vadd.f32 %v1069, %v836
        %v1071 = vadd.f32 %v1070, %v838
        %1072 = vadd.xlane.f32.xlu0 %v1071
        %v1073 = vpop.xlane.xlu0 %1072
        %v1074 = vadd.f32 %v840, %v842
        %v1075 = vadd.f32 %v1074, %v844
        %v1076 = vadd.f32 %v1075, %v846
        %1077 = vadd.xlane.f32.xlu0 %v1076
        %v1078 = vpop.xlane.xlu0 %1077
        %v1079 = vadd.f32 %v848, %v850
        %v1080 = vadd.f32 %v1079, %v852
        %v1081 = vadd.f32 %v1080, %v854
        %1082 = vadd.xlane.f32.xlu0 %v1081
        %v1083 = vpop.xlane.xlu0 %1082
        %v1084 = vadd.f32 %v856, %v858
        %v1085 = vadd.f32 %v1084, %v860
        %v1086 = vadd.f32 %v1085, %v862
        %1087 = vadd.xlane.f32.xlu0 %v1086
        %v1088 = vpop.xlane.xlu0 %1087
        %v1089 = vadd.f32 %v864, %v866
        %v1090 = vadd.f32 %v1089, %v868
        %v1091 = vadd.f32 %v1090, %v870
        %1092 = vadd.xlane.f32.xlu0 %v1091
        %v1093 = vpop.xlane.xlu0 %1092
        %v1094 = vadd.f32 %v872, %v874
        %v1095 = vadd.f32 %v1094, %v876
        %v1096 = vadd.f32 %v1095, %v878
        %1097 = vadd.xlane.f32.xlu0 %v1096
        %v1098 = vpop.xlane.xlu0 %1097
        %v1099 = vadd.f32 %v880, %v882
        %v1100 = vadd.f32 %v1099, %v884
        %v1101 = vadd.f32 %v1100, %v886
        %1102 = vadd.xlane.f32.xlu0 %v1101
        %v1103 = vpop.xlane.xlu0 %1102
        %v1104 = vadd.f32 %v888, %v890
        %v1105 = vadd.f32 %v1104, %v892
        %v1106 = vadd.f32 %v1105, %v894
        %1107 = vadd.xlane.f32.xlu0 %v1106
        %v1108 = vpop.xlane.xlu0 %1107
        %v1109 = vadd.f32 %v896, %v898
        %v1110 = vadd.f32 %v1109, %v900
        %v1111 = vadd.f32 %v1110, %v902
        %1112 = vadd.xlane.f32.xlu0 %v1111
        %v1113 = vpop.xlane.xlu0 %1112
        %v1114 = vadd.f32 %v904, %v906
        %v1115 = vadd.f32 %v1114, %v908
        %v1116 = vadd.f32 %v1115, %v910
        %1117 = vadd.xlane.f32.xlu0 %v1116
        %v1118 = vpop.xlane.xlu0 %1117
        %v1119 = vadd.f32 %v912, %v914
        %v1120 = vadd.f32 %v1119, %v916
        %v1121 = vadd.f32 %v1120, %v918
        %1122 = vadd.xlane.f32.xlu0 %v1121
        %v1123 = vpop.xlane.xlu0 %1122
        %v1124 = vadd.f32 %v920, %v922
        %v1125 = vadd.f32 %v1124, %v924
        %v1126 = vadd.f32 %v1125, %v926
        %1127 = vadd.xlane.f32.xlu0 %v1126
        %v1128 = vpop.xlane.xlu0 %1127
        %v1129 = vadd.f32 %v928, %v930
        %v1130 = vadd.f32 %v1129, %v932
        %v1131 = vadd.f32 %v1130, %v934
        %1132 = vadd.xlane.f32.xlu0 %v1131
        %v1133 = vpop.xlane.xlu0 %1132
        %v1134 = vadd.f32 %v936, %v938
        %v1135 = vadd.f32 %v1134, %v940
        %v1136 = vadd.f32 %v1135, %v942
        %1137 = vadd.xlane.f32.xlu0 %v1136
        %v1138 = vpop.xlane.xlu0 %1137
        %v1139 = vadd.f32 %v944, %v946
        %v1140 = vadd.f32 %v1139, %v948
        %v1141 = vadd.f32 %v1140, %v950
        %1142 = vadd.xlane.f32.xlu0 %v1141
        %v1143 = vpop.xlane.xlu0 %1142
        %v1144 = vadd.f32 %v952, %v954
        %v1145 = vadd.f32 %v1144, %v956
        %v1146 = vadd.f32 %v1145, %v958
        %1147 = vadd.xlane.f32.xlu0 %v1146
        %v1148 = vpop.xlane.xlu0 %1147
        %v1149 = vadd.f32 %v960, %v962
        %v1150 = vadd.f32 %v1149, %v964
        %v1151 = vadd.f32 %v1150, %v966
        %1152 = vadd.xlane.f32.xlu0 %v1151
        %v1153 = vpop.xlane.xlu0 %1152
        %v1154 = vadd.f32 %v968, %v970
        %v1155 = vadd.f32 %v1154, %v972
        %v1156 = vadd.f32 %v1155, %v974
        %1157 = vadd.xlane.f32.xlu0 %v1156
        %v1158 = vpop.xlane.xlu0 %1157
        %v1159 = vadd.f32 %v976, %v978
        %v1160 = vadd.f32 %v1159, %v980
        %v1161 = vadd.f32 %v1160, %v982
        %1162 = vadd.xlane.f32.xlu0 %v1161
        %v1163 = vpop.xlane.xlu0 %1162
        %v1164 = vadd.f32 %v984, %v986
        %v1165 = vadd.f32 %v1164, %v988
        %v1166 = vadd.f32 %v1165, %v990
        %1167 = vadd.xlane.f32.xlu0 %v1166
        %v1168 = vpop.xlane.xlu0 %1167
        %v1169 = vadd.f32 %v992, %v994
        %v1170 = vadd.f32 %v1169, %v996
        %v1171 = vadd.f32 %v1170, %v998
        %1172 = vadd.xlane.f32.xlu0 %v1171
        %v1173 = vpop.xlane.xlu0 %1172
        %v1174 = vadd.f32 %v1000, %v1002
        %v1175 = vadd.f32 %v1174, %v1004
        %v1176 = vadd.f32 %v1175, %v1006
        %1177 = vadd.xlane.f32.xlu0 %v1176
        %v1178 = vpop.xlane.xlu0 %1177
        %v1179 = vadd.f32 %v1008, %v1010
        %v1180 = vadd.f32 %v1179, %v1012
        %v1181 = vadd.f32 %v1180, %v1014
        %1182 = vadd.xlane.f32.xlu0 %v1181
        %v1183 = vpop.xlane.xlu0 %1182
        %v1184 = vadd.f32 %v1016, %v1018
        %v1185 = vadd.f32 %v1184, %v1020
        %v1186 = vadd.f32 %v1185, %v1022
        %1187 = vadd.xlane.f32.xlu0 %v1186
        %v1188 = vpop.xlane.xlu0 %1187
        %v1189 = vadd.f32 %v1024, %v1026
        %v1190 = vadd.f32 %v1189, %v1028
        %v1191 = vadd.f32 %v1190, %v1030
        %1192 = vadd.xlane.f32.xlu0 %v1191
        %v1193 = vpop.xlane.xlu0 %1192
        %v1194 = vadd.f32 %v1032, %v1034
        %v1195 = vadd.f32 %v1194, %v1036
        %v1196 = vadd.f32 %v1195, %v1038
        %1197 = vadd.xlane.f32.xlu0 %v1196
        %v1198 = vpop.xlane.xlu0 %1197
        %v1199 = vlog2.pop %v1043
        %v1200 = vmul.f32 %v1199, 0.6931472
        %v1201 = vlog2.pop %v1048
        %v1202 = vmul.f32 %v1201, 0.6931472
        %v1203 = vlog2.pop %v1053
        %v1204 = vmul.f32 %v1203, 0.6931472
        %v1205 = vlog2.pop %v1058
        %v1206 = vmul.f32 %v1205, 0.6931472
        %v1207 = vlog2.pop %v1063
        %v1208 = vmul.f32 %v1207, 0.6931472
        %v1209 = vlog2.pop %v1068
        %v1210 = vmul.f32 %v1209, 0.6931472
        %v1211 = vlog2.pop %v1073
        %v1212 = vmul.f32 %v1211, 0.6931472
        %v1213 = vlog2.pop %v1078
        %v1214 = vmul.f32 %v1213, 0.6931472
        %v1215 = vlog2.pop %v1083
        %v1216 = vmul.f32 %v1215, 0.6931472
        %v1217 = vlog2.pop %v1088
        %v1218 = vmul.f32 %v1217, 0.6931472
        %v1219 = vlog2.pop %v1093
        %v1220 = vmul.f32 %v1219, 0.6931472
        %v1221 = vlog2.pop %v1098
        %v1222 = vmul.f32 %v1221, 0.6931472
        %v1223 = vlog2.pop %v1103
        %v1224 = vmul.f32 %v1223, 0.6931472
        %v1225 = vlog2.pop %v1108
        %v1226 = vmul.f32 %v1225, 0.6931472
        %v1227 = vlog2.pop %v1113
        %v1228 = vmul.f32 %v1227, 0.6931472
        %v1229 = vlog2.pop %v1118
        %v1230 = vmul.f32 %v1229, 0.6931472
        %v1231 = vlog2.pop %v1123
        %v1232 = vmul.f32 %v1231, 0.6931472
        %v1233 = vlog2.pop %v1128
        %v1234 = vmul.f32 %v1233, 0.6931472
        %v1235 = vlog2.pop %v1133
        %v1236 = vmul.f32 %v1235, 0.6931472
        %v1237 = vlog2.pop %v1138
        %v1238 = vmul.f32 %v1237, 0.6931472
        %v1239 = vlog2.pop %v1143
        %v1240 = vmul.f32 %v1239, 0.6931472
        %v1241 = vlog2.pop %v1148
        %v1242 = vmul.f32 %v1241, 0.6931472
        %v1243 = vlog2.pop %v1153
        %v1244 = vmul.f32 %v1243, 0.6931472
        %v1245 = vlog2.pop %v1158
        %v1246 = vmul.f32 %v1245, 0.6931472
        %v1247 = vlog2.pop %v1163
        %v1248 = vmul.f32 %v1247, 0.6931472
        %v1249 = vlog2.pop %v1168
        %v1250 = vmul.f32 %v1249, 0.6931472
        %v1251 = vlog2.pop %v1173
        %v1252 = vmul.f32 %v1251, 0.6931472
        %v1253 = vlog2.pop %v1178
        %v1254 = vmul.f32 %v1253, 0.6931472
        %v1255 = vlog2.pop %v1183
        %v1256 = vmul.f32 %v1255, 0.6931472
        %v1257 = vlog2.pop %v1188
        %v1258 = vmul.f32 %v1257, 0.6931472
        %v1259 = vlog2.pop %v1193
        %v1260 = vmul.f32 %v1259, 0.6931472
        %v1261 = vlog2.pop %v1198
        %v1262 = vmul.f32 %v1261, 0.6931472
        %v1263 = vmul.f32 %v367, 0.95
        %v1264 = vmul.f32 %v368, 0.95
        %v1265 = vmul.f32 %v369, 0.95
        %v1266 = vmul.f32 %v370, 0.95
        %v1267 = vmul.f32 %v371, 0.95
        %v1268 = vmul.f32 %v372, 0.95
        %v1269 = vmul.f32 %v373, 0.95
        %v1270 = vmul.f32 %v374, 0.95
        %v1271 = vmul.f32 %v375, 0.95
        %v1272 = vmul.f32 %v376, 0.95
        %v1273 = vmul.f32 %v377, 0.95
        %v1274 = vmul.f32 %v378, 0.95
        %v1275 = vmul.f32 %v379, 0.95
        %v1276 = vmul.f32 %v380, 0.95
        %v1277 = vmul.f32 %v381, 0.95
        %v1278 = vmul.f32 %v382, 0.95
        %v1279 = vmul.f32 %v383, 0.95
        %v1280 = vmul.f32 %v384, 0.95
        %v1281 = vmul.f32 %v385, 0.95
        %v1282 = vmul.f32 %v386, 0.95
        %v1283 = vmul.f32 %v387, 0.95
        %v1284 = vmul.f32 %v388, 0.95
        %v1285 = vmul.f32 %v389, 0.95
        %v1286 = vmul.f32 %v390, 0.95
        %v1287 = vmul.f32 %v391, 0.95
        %v1288 = vmul.f32 %v392, 0.95
        %v1289 = vmul.f32 %v393, 0.95
        %v1290 = vmul.f32 %v394, 0.95
        %v1291 = vmul.f32 %v395, 0.95
        %v1292 = vmul.f32 %v396, 0.95
        %v1293 = vmul.f32 %v397, 0.95
        %v1294 = vmul.f32 %v398, 0.95
        %v1295 = vmul.f32 %v399, 0.95
        %v1296 = vmul.f32 %v400, 0.95
        %v1297 = vmul.f32 %v401, 0.95
        %v1298 = vmul.f32 %v402, 0.95
        %v1299 = vmul.f32 %v403, 0.95
        %v1300 = vmul.f32 %v404, 0.95
        %v1301 = vmul.f32 %v405, 0.95
        %v1302 = vmul.f32 %v406, 0.95
        %v1303 = vmul.f32 %v407, 0.95
        %v1304 = vmul.f32 %v408, 0.95
        %v1305 = vmul.f32 %v409, 0.95
        %v1306 = vmul.f32 %v410, 0.95
        %v1307 = vmul.f32 %v411, 0.95
        %v1308 = vmul.f32 %v412, 0.95
        %v1309 = vmul.f32 %v413, 0.95
        %v1310 = vmul.f32 %v414, 0.95
        %v1311 = vmul.f32 %v415, 0.95
        %v1312 = vmul.f32 %v416, 0.95
        %v1313 = vmul.f32 %v417, 0.95
        %v1314 = vmul.f32 %v418, 0.95
        %v1315 = vmul.f32 %v419, 0.95
        %v1316 = vmul.f32 %v420, 0.95
        %v1317 = vmul.f32 %v421, 0.95
        %v1318 = vmul.f32 %v422, 0.95
        %v1319 = vmul.f32 %v423, 0.95
        %v1320 = vmul.f32 %v424, 0.95
        %v1321 = vmul.f32 %v425, 0.95
        %v1322 = vmul.f32 %v426, 0.95
        %v1323 = vmul.f32 %v427, 0.95
        %v1324 = vmul.f32 %v428, 0.95
        %v1325 = vmul.f32 %v429, 0.95
        %v1326 = vmul.f32 %v430, 0.95
        %v1327 = vmul.f32 %v431, 0.95
        %v1328 = vmul.f32 %v432, 0.95
        %v1329 = vmul.f32 %v433, 0.95
        %v1330 = vmul.f32 %v434, 0.95
        %v1331 = vmul.f32 %v435, 0.95
        %v1332 = vmul.f32 %v436, 0.95
        %v1333 = vmul.f32 %v437, 0.95
        %v1334 = vmul.f32 %v438, 0.95
        %v1335 = vmul.f32 %v439, 0.95
        %v1336 = vmul.f32 %v440, 0.95
        %v1337 = vmul.f32 %v441, 0.95
        %v1338 = vmul.f32 %v442, 0.95
        %v1339 = vmul.f32 %v443, 0.95
        %v1340 = vmul.f32 %v444, 0.95
        %v1341 = vmul.f32 %v445, 0.95
        %v1342 = vmul.f32 %v446, 0.95
        %v1343 = vmul.f32 %v447, 0.95
        %v1344 = vmul.f32 %v448, 0.95
        %v1345 = vmul.f32 %v449, 0.95
        %v1346 = vmul.f32 %v450, 0.95
        %v1347 = vmul.f32 %v451, 0.95
        %v1348 = vmul.f32 %v452, 0.95
        %v1349 = vmul.f32 %v453, 0.95
        %v1350 = vmul.f32 %v454, 0.95
        %v1351 = vmul.f32 %v455, 0.95
        %v1352 = vmul.f32 %v456, 0.95
        %v1353 = vmul.f32 %v457, 0.95
        %v1354 = vmul.f32 %v458, 0.95
        %v1355 = vmul.f32 %v459, 0.95
        %v1356 = vmul.f32 %v460, 0.95
        %v1357 = vmul.f32 %v461, 0.95
        %v1358 = vmul.f32 %v462, 0.95
        %v1359 = vmul.f32 %v463, 0.95
        %v1360 = vmul.f32 %v464, 0.95
        %v1361 = vmul.f32 %v465, 0.95
        %v1362 = vmul.f32 %v466, 0.95
        %v1363 = vmul.f32 %v467, 0.95
        %v1364 = vmul.f32 %v468, 0.95
        %v1365 = vmul.f32 %v469, 0.95
        %v1366 = vmul.f32 %v470, 0.95
        %v1367 = vmul.f32 %v471, 0.95
        %v1368 = vmul.f32 %v472, 0.95
        %v1369 = vmul.f32 %v473, 0.95
        %v1370 = vmul.f32 %v474, 0.95
        %v1371 = vmul.f32 %v475, 0.95
        %v1372 = vmul.f32 %v476, 0.95
        %v1373 = vmul.f32 %v477, 0.95
        %v1374 = vmul.f32 %v478, 0.95
        %v1375 = vmul.f32 %v479, 0.95
        %v1376 = vmul.f32 %v480, 0.95
        %v1377 = vmul.f32 %v481, 0.95
        %v1378 = vmul.f32 %v482, 0.95
        %v1379 = vmul.f32 %v483, 0.95
        %v1380 = vmul.f32 %v484, 0.95
        %v1381 = vmul.f32 %v485, 0.95
        %v1382 = vmul.f32 %v486, 0.95
        %v1383 = vmul.f32 %v487, 0.95
        %v1384 = vmul.f32 %v488, 0.95
        %v1385 = vmul.f32 %v489, 0.95
        %v1386 = vmul.f32 %v490, 0.95
        %v1387 = vmul.f32 %v491, 0.95
        %v1388 = vmul.f32 %v492, 0.95
        %v1389 = vmul.f32 %v493, 0.95
        %v1390 = vmul.f32 %v494, 0.95
        %v1391 = vadd.f32 %v1263, 9.765625e-05
        %v1392 = vadd.f32 %v1264, 9.765625e-05
        %v1393 = vadd.f32 %v1265, 9.765625e-05
        %v1394 = vadd.f32 %v1266, 9.765625e-05
        %v1395 = vadd.f32 %v1267, 9.765625e-05
        %v1396 = vadd.f32 %v1268, 9.765625e-05
        %v1397 = vadd.f32 %v1269, 9.765625e-05
        %v1398 = vadd.f32 %v1270, 9.765625e-05
        %v1399 = vadd.f32 %v1271, 9.765625e-05
        %v1400 = vadd.f32 %v1272, 9.765625e-05
        %v1401 = vadd.f32 %v1273, 9.765625e-05
        %v1402 = vadd.f32 %v1274, 9.765625e-05
        %v1403 = vadd.f32 %v1275, 9.765625e-05
        %v1404 = vadd.f32 %v1276, 9.765625e-05
        %v1405 = vadd.f32 %v1277, 9.765625e-05
        %v1406 = vadd.f32 %v1278, 9.765625e-05
        %v1407 = vadd.f32 %v1279, 9.765625e-05
        %v1408 = vadd.f32 %v1280, 9.765625e-05
        %v1409 = vadd.f32 %v1281, 9.765625e-05
        %v1410 = vadd.f32 %v1282, 9.765625e-05
        %v1411 = vadd.f32 %v1283, 9.765625e-05
        %v1412 = vadd.f32 %v1284, 9.765625e-05
        %v1413 = vadd.f32 %v1285, 9.765625e-05
        %v1414 = vadd.f32 %v1286, 9.765625e-05
        %v1415 = vadd.f32 %v1287, 9.765625e-05
        %v1416 = vadd.f32 %v1288, 9.765625e-05
        %v1417 = vadd.f32 %v1289, 9.765625e-05
        %v1418 = vadd.f32 %v1290, 9.765625e-05
        %v1419 = vadd.f32 %v1291, 9.765625e-05
        %v1420 = vadd.f32 %v1292, 9.765625e-05
        %v1421 = vadd.f32 %v1293, 9.765625e-05
        %v1422 = vadd.f32 %v1294, 9.765625e-05
        %v1423 = vadd.f32 %v1295, 9.765625e-05
        %v1424 = vadd.f32 %v1296, 9.765625e-05
        %v1425 = vadd.f32 %v1297, 9.765625e-05
        %v1426 = vadd.f32 %v1298, 9.765625e-05
        %v1427 = vadd.f32 %v1299, 9.765625e-05
        %v1428 = vadd.f32 %v1300, 9.765625e-05
        %v1429 = vadd.f32 %v1301, 9.765625e-05
        %v1430 = vadd.f32 %v1302, 9.765625e-05
        %v1431 = vadd.f32 %v1303, 9.765625e-05
        %v1432 = vadd.f32 %v1304, 9.765625e-05
        %v1433 = vadd.f32 %v1305, 9.765625e-05
        %v1434 = vadd.f32 %v1306, 9.765625e-05
        %v1435 = vadd.f32 %v1307, 9.765625e-05
        %v1436 = vadd.f32 %v1308, 9.765625e-05
        %v1437 = vadd.f32 %v1309, 9.765625e-05
        %v1438 = vadd.f32 %v1310, 9.765625e-05
        %v1439 = vadd.f32 %v1311, 9.765625e-05
        %v1440 = vadd.f32 %v1312, 9.765625e-05
        %v1441 = vadd.f32 %v1313, 9.765625e-05
        %v1442 = vadd.f32 %v1314, 9.765625e-05
        %v1443 = vadd.f32 %v1315, 9.765625e-05
        %v1444 = vadd.f32 %v1316, 9.765625e-05
        %v1445 = vadd.f32 %v1317, 9.765625e-05
        %v1446 = vadd.f32 %v1318, 9.765625e-05
        %v1447 = vadd.f32 %v1319, 9.765625e-05
        %v1448 = vadd.f32 %v1320, 9.765625e-05
        %v1449 = vadd.f32 %v1321, 9.765625e-05
        %v1450 = vadd.f32 %v1322, 9.765625e-05
        %v1451 = vadd.f32 %v1323, 9.765625e-05
        %v1452 = vadd.f32 %v1324, 9.765625e-05
        %v1453 = vadd.f32 %v1325, 9.765625e-05
        %v1454 = vadd.f32 %v1326, 9.765625e-05
        %v1455 = vadd.f32 %v1327, 9.765625e-05
        %v1456 = vadd.f32 %v1328, 9.765625e-05
        %v1457 = vadd.f32 %v1329, 9.765625e-05
        %v1458 = vadd.f32 %v1330, 9.765625e-05
        %v1459 = vadd.f32 %v1331, 9.765625e-05
        %v1460 = vadd.f32 %v1332, 9.765625e-05
        %v1461 = vadd.f32 %v1333, 9.765625e-05
        %v1462 = vadd.f32 %v1334, 9.765625e-05
        %v1463 = vadd.f32 %v1335, 9.765625e-05
        %v1464 = vadd.f32 %v1336, 9.765625e-05
        %v1465 = vadd.f32 %v1337, 9.765625e-05
        %v1466 = vadd.f32 %v1338, 9.765625e-05
        %v1467 = vadd.f32 %v1339, 9.765625e-05
        %v1468 = vadd.f32 %v1340, 9.765625e-05
        %v1469 = vadd.f32 %v1341, 9.765625e-05
        %v1470 = vadd.f32 %v1342, 9.765625e-05
        %v1471 = vadd.f32 %v1343, 9.765625e-05
        %v1472 = vadd.f32 %v1344, 9.765625e-05
        %v1473 = vadd.f32 %v1345, 9.765625e-05
        %v1474 = vadd.f32 %v1346, 9.765625e-05
        %v1475 = vadd.f32 %v1347, 9.765625e-05
        %v1476 = vadd.f32 %v1348, 9.765625e-05
        %v1477 = vadd.f32 %v1349, 9.765625e-05
        %v1478 = vadd.f32 %v1350, 9.765625e-05
        %v1479 = vadd.f32 %v1351, 9.765625e-05
        %v1480 = vadd.f32 %v1352, 9.765625e-05
        %v1481 = vadd.f32 %v1353, 9.765625e-05
        %v1482 = vadd.f32 %v1354, 9.765625e-05
        %v1483 = vadd.f32 %v1355, 9.765625e-05
        %v1484 = vadd.f32 %v1356, 9.765625e-05
        %v1485 = vadd.f32 %v1357, 9.765625e-05
        %v1486 = vadd.f32 %v1358, 9.765625e-05
        %v1487 = vadd.f32 %v1359, 9.765625e-05
        %v1488 = vadd.f32 %v1360, 9.765625e-05
        %v1489 = vadd.f32 %v1361, 9.765625e-05
        %v1490 = vadd.f32 %v1362, 9.765625e-05
        %v1491 = vadd.f32 %v1363, 9.765625e-05
        %v1492 = vadd.f32 %v1364, 9.765625e-05
        %v1493 = vadd.f32 %v1365, 9.765625e-05
        %v1494 = vadd.f32 %v1366, 9.765625e-05
        %v1495 = vadd.f32 %v1367, 9.765625e-05
        %v1496 = vadd.f32 %v1368, 9.765625e-05
        %v1497 = vadd.f32 %v1369, 9.765625e-05
        %v1498 = vadd.f32 %v1370, 9.765625e-05
        %v1499 = vadd.f32 %v1371, 9.765625e-05
        %v1500 = vadd.f32 %v1372, 9.765625e-05
        %v1501 = vadd.f32 %v1373, 9.765625e-05
        %v1502 = vadd.f32 %v1374, 9.765625e-05
        %v1503 = vadd.f32 %v1375, 9.765625e-05
        %v1504 = vadd.f32 %v1376, 9.765625e-05
        %v1505 = vadd.f32 %v1377, 9.765625e-05
        %v1506 = vadd.f32 %v1378, 9.765625e-05
        %v1507 = vadd.f32 %v1379, 9.765625e-05
        %v1508 = vadd.f32 %v1380, 9.765625e-05
        %v1509 = vadd.f32 %v1381, 9.765625e-05
        %v1510 = vadd.f32 %v1382, 9.765625e-05
        %v1511 = vadd.f32 %v1383, 9.765625e-05
        %v1512 = vadd.f32 %v1384, 9.765625e-05
        %v1513 = vadd.f32 %v1385, 9.765625e-05
        %v1514 = vadd.f32 %v1386, 9.765625e-05
        %v1515 = vadd.f32 %v1387, 9.765625e-05
        %v1516 = vadd.f32 %v1388, 9.765625e-05
        %v1517 = vadd.f32 %v1389, 9.765625e-05
        %v1518 = vadd.f32 %v1390, 9.765625e-05
        %v1519 = vadd.f32 %v367, %v368
        %v1520 = vadd.f32 %v1519, %v369
        %v1521 = vadd.f32 %v1520, %v370
        %1522 = vadd.xlane.f32.xlu0 %v1521
        %v1523 = vpop.xlane.xlu0 %1522
        %v1524 = vadd.f32 %v371, %v372
        %v1525 = vadd.f32 %v1524, %v373
        %v1526 = vadd.f32 %v1525, %v374
        %1527 = vadd.xlane.f32.xlu0 %v1526
        %v1528 = vpop.xlane.xlu0 %1527
        %v1529 = vadd.f32 %v375, %v376
        %v1530 = vadd.f32 %v1529, %v377
        %v1531 = vadd.f32 %v1530, %v378
        %1532 = vadd.xlane.f32.xlu0 %v1531
        %v1533 = vpop.xlane.xlu0 %1532
        %v1534 = vadd.f32 %v379, %v380
        %v1535 = vadd.f32 %v1534, %v381
        %v1536 = vadd.f32 %v1535, %v382
        %1537 = vadd.xlane.f32.xlu0 %v1536
        %v1538 = vpop.xlane.xlu0 %1537
        %v1539 = vadd.f32 %v383, %v384
        %v1540 = vadd.f32 %v1539, %v385
        %v1541 = vadd.f32 %v1540, %v386
        %1542 = vadd.xlane.f32.xlu0 %v1541
        %v1543 = vpop.xlane.xlu0 %1542
        %v1544 = vadd.f32 %v387, %v388
        %v1545 = vadd.f32 %v1544, %v389
        %v1546 = vadd.f32 %v1545, %v390
        %1547 = vadd.xlane.f32.xlu0 %v1546
        %v1548 = vpop.xlane.xlu0 %1547
        %v1549 = vadd.f32 %v391, %v392
        %v1550 = vadd.f32 %v1549, %v393
        %v1551 = vadd.f32 %v1550, %v394
        %1552 = vadd.xlane.f32.xlu0 %v1551
        %v1553 = vpop.xlane.xlu0 %1552
        %v1554 = vadd.f32 %v395, %v396
        %v1555 = vadd.f32 %v1554, %v397
        %v1556 = vadd.f32 %v1555, %v398
        %1557 = vadd.xlane.f32.xlu0 %v1556
        %v1558 = vpop.xlane.xlu0 %1557
        %v1559 = vadd.f32 %v399, %v400
        %v1560 = vadd.f32 %v1559, %v401
        %v1561 = vadd.f32 %v1560, %v402
        %1562 = vadd.xlane.f32.xlu0 %v1561
        %v1563 = vpop.xlane.xlu0 %1562
        %v1564 = vadd.f32 %v403, %v404
        %v1565 = vadd.f32 %v1564, %v405
        %v1566 = vadd.f32 %v1565, %v406
        %1567 = vadd.xlane.f32.xlu0 %v1566
        %v1568 = vpop.xlane.xlu0 %1567
        %v1569 = vadd.f32 %v407, %v408
        %v1570 = vadd.f32 %v1569, %v409
        %v1571 = vadd.f32 %v1570, %v410
        %1572 = vadd.xlane.f32.xlu0 %v1571
        %v1573 = vpop.xlane.xlu0 %1572
        %v1574 = vadd.f32 %v411, %v412
        %v1575 = vadd.f32 %v1574, %v413
        %v1576 = vadd.f32 %v1575, %v414
        %1577 = vadd.xlane.f32.xlu0 %v1576
        %v1578 = vpop.xlane.xlu0 %1577
        %v1579 = vadd.f32 %v415, %v416
        %v1580 = vadd.f32 %v1579, %v417
        %v1581 = vadd.f32 %v1580, %v418
        %1582 = vadd.xlane.f32.xlu0 %v1581
        %v1583 = vpop.xlane.xlu0 %1582
        %v1584 = vadd.f32 %v419, %v420
        %v1585 = vadd.f32 %v1584, %v421
        %v1586 = vadd.f32 %v1585, %v422
        %1587 = vadd.xlane.f32.xlu0 %v1586
        %v1588 = vpop.xlane.xlu0 %1587
        %v1589 = vadd.f32 %v423, %v424
        %v1590 = vadd.f32 %v1589, %v425
        %v1591 = vadd.f32 %v1590, %v426
        %1592 = vadd.xlane.f32.xlu0 %v1591
        %v1593 = vpop.xlane.xlu0 %1592
        %v1594 = vadd.f32 %v427, %v428
        %v1595 = vadd.f32 %v1594, %v429
        %v1596 = vadd.f32 %v1595, %v430
        %1597 = vadd.xlane.f32.xlu0 %v1596
        %v1598 = vpop.xlane.xlu0 %1597
        %v1599 = vadd.f32 %v431, %v432
        %v1600 = vadd.f32 %v1599, %v433
        %v1601 = vadd.f32 %v1600, %v434
        %1602 = vadd.xlane.f32.xlu0 %v1601
        %v1603 = vpop.xlane.xlu0 %1602
        %v1604 = vadd.f32 %v435, %v436
        %v1605 = vadd.f32 %v1604, %v437
        %v1606 = vadd.f32 %v1605, %v438
        %1607 = vadd.xlane.f32.xlu0 %v1606
        %v1608 = vpop.xlane.xlu0 %1607
        %v1609 = vadd.f32 %v439, %v440
        %v1610 = vadd.f32 %v1609, %v441
        %v1611 = vadd.f32 %v1610, %v442
        %1612 = vadd.xlane.f32.xlu0 %v1611
        %v1613 = vpop.xlane.xlu0 %1612
        %v1614 = vadd.f32 %v443, %v444
        %v1615 = vadd.f32 %v1614, %v445
        %v1616 = vadd.f32 %v1615, %v446
        %1617 = vadd.xlane.f32.xlu0 %v1616
        %v1618 = vpop.xlane.xlu0 %1617
        %v1619 = vadd.f32 %v447, %v448
        %v1620 = vadd.f32 %v1619, %v449
        %v1621 = vadd.f32 %v1620, %v450
        %1622 = vadd.xlane.f32.xlu0 %v1621
        %v1623 = vpop.xlane.xlu0 %1622
        %v1624 = vadd.f32 %v451, %v452
        %v1625 = vadd.f32 %v1624, %v453
        %v1626 = vadd.f32 %v1625, %v454
        %1627 = vadd.xlane.f32.xlu0 %v1626
        %v1628 = vpop.xlane.xlu0 %1627
        %v1629 = vadd.f32 %v455, %v456
        %v1630 = vadd.f32 %v1629, %v457
        %v1631 = vadd.f32 %v1630, %v458
        %1632 = vadd.xlane.f32.xlu0 %v1631
        %v1633 = vpop.xlane.xlu0 %1632
        %v1634 = vadd.f32 %v459, %v460
        %v1635 = vadd.f32 %v1634, %v461
        %v1636 = vadd.f32 %v1635, %v462
        %1637 = vadd.xlane.f32.xlu0 %v1636
        %v1638 = vpop.xlane.xlu0 %1637
        %v1639 = vadd.f32 %v463, %v464
        %v1640 = vadd.f32 %v1639, %v465
        %v1641 = vadd.f32 %v1640, %v466
        %1642 = vadd.xlane.f32.xlu0 %v1641
        %v1643 = vpop.xlane.xlu0 %1642
        %v1644 = vadd.f32 %v467, %v468
        %v1645 = vadd.f32 %v1644, %v469
        %v1646 = vadd.f32 %v1645, %v470
        %1647 = vadd.xlane.f32.xlu0 %v1646
        %v1648 = vpop.xlane.xlu0 %1647
        %v1649 = vadd.f32 %v471, %v472
        %v1650 = vadd.f32 %v1649, %v473
        %v1651 = vadd.f32 %v1650, %v474
        %1652 = vadd.xlane.f32.xlu0 %v1651
        %v1653 = vpop.xlane.xlu0 %1652
        %v1654 = vadd.f32 %v475, %v476
        %v1655 = vadd.f32 %v1654, %v477
        %v1656 = vadd.f32 %v1655, %v478
        %1657 = vadd.xlane.f32.xlu0 %v1656
        %v1658 = vpop.xlane.xlu0 %1657
        %v1659 = vadd.f32 %v479, %v480
        %v1660 = vadd.f32 %v1659, %v481
        %v1661 = vadd.f32 %v1660, %v482
        %1662 = vadd.xlane.f32.xlu0 %v1661
        %v1663 = vpop.xlane.xlu0 %1662
        %v1664 = vadd.f32 %v483, %v484
        %v1665 = vadd.f32 %v1664, %v485
        %v1666 = vadd.f32 %v1665, %v486
        %1667 = vadd.xlane.f32.xlu0 %v1666
        %v1668 = vpop.xlane.xlu0 %1667
        %v1669 = vadd.f32 %v487, %v488
        %v1670 = vadd.f32 %v1669, %v489
        %v1671 = vadd.f32 %v1670, %v490
        %1672 = vadd.xlane.f32.xlu0 %v1671
        %v1673 = vpop.xlane.xlu0 %1672
        %v1674 = vadd.f32 %v491, %v492
        %v1675 = vadd.f32 %v1674, %v493
        %v1676 = vadd.f32 %v1675, %v494
        %1677 = vadd.xlane.f32.xlu0 %v1676
        %v1678 = vpop.xlane.xlu0 %1677
        %v1679 = vmul.f32 %v1523, 0.95
        %v1680 = vmul.f32 %v1528, 0.95
        %v1681 = vmul.f32 %v1533, 0.95
        %v1682 = vmul.f32 %v1538, 0.95
        %v1683 = vmul.f32 %v1543, 0.95
        %v1684 = vmul.f32 %v1548, 0.95
        %v1685 = vmul.f32 %v1553, 0.95
        %v1686 = vmul.f32 %v1558, 0.95
        %v1687 = vmul.f32 %v1563, 0.95
        %v1688 = vmul.f32 %v1568, 0.95
        %v1689 = vmul.f32 %v1573, 0.95
        %v1690 = vmul.f32 %v1578, 0.95
        %v1691 = vmul.f32 %v1583, 0.95
        %v1692 = vmul.f32 %v1588, 0.95
        %v1693 = vmul.f32 %v1593, 0.95
        %v1694 = vmul.f32 %v1598, 0.95
        %v1695 = vmul.f32 %v1603, 0.95
        %v1696 = vmul.f32 %v1608, 0.95
        %v1697 = vmul.f32 %v1613, 0.95
        %v1698 = vmul.f32 %v1618, 0.95
        %v1699 = vmul.f32 %v1623, 0.95
        %v1700 = vmul.f32 %v1628, 0.95
        %v1701 = vmul.f32 %v1633, 0.95
        %v1702 = vmul.f32 %v1638, 0.95
        %v1703 = vmul.f32 %v1643, 0.95
        %v1704 = vmul.f32 %v1648, 0.95
        %v1705 = vmul.f32 %v1653, 0.95
        %v1706 = vmul.f32 %v1658, 0.95
        %v1707 = vmul.f32 %v1663, 0.95
        %v1708 = vmul.f32 %v1668, 0.95
        %v1709 = vmul.f32 %v1673, 0.95
        %v1710 = vmul.f32 %v1678, 0.95
        %v1711 = vadd.f32 %v1679, 0.05
        %v1712 = vadd.f32 %v1680, 0.05
        %v1713 = vadd.f32 %v1681, 0.05
        %v1714 = vadd.f32 %v1682, 0.05
        %v1715 = vadd.f32 %v1683, 0.05
        %v1716 = vadd.f32 %v1684, 0.05
        %v1717 = vadd.f32 %v1685, 0.05
        %v1718 = vadd.f32 %v1686, 0.05
        %v1719 = vadd.f32 %v1687, 0.05
        %v1720 = vadd.f32 %v1688, 0.05
        %v1721 = vadd.f32 %v1689, 0.05
        %v1722 = vadd.f32 %v1690, 0.05
        %v1723 = vadd.f32 %v1691, 0.05
        %v1724 = vadd.f32 %v1692, 0.05
        %v1725 = vadd.f32 %v1693, 0.05
        %v1726 = vadd.f32 %v1694, 0.05
        %v1727 = vadd.f32 %v1695, 0.05
        %v1728 = vadd.f32 %v1696, 0.05
        %v1729 = vadd.f32 %v1697, 0.05
        %v1730 = vadd.f32 %v1698, 0.05
        %v1731 = vadd.f32 %v1699, 0.05
        %v1732 = vadd.f32 %v1700, 0.05
        %v1733 = vadd.f32 %v1701, 0.05
        %v1734 = vadd.f32 %v1702, 0.05
        %v1735 = vadd.f32 %v1703, 0.05
        %v1736 = vadd.f32 %v1704, 0.05
        %v1737 = vadd.f32 %v1705, 0.05
        %v1738 = vadd.f32 %v1706, 0.05
        %v1739 = vadd.f32 %v1707, 0.05
        %v1740 = vadd.f32 %v1708, 0.05
        %v1741 = vadd.f32 %v1709, 0.05
        %v1742 = vadd.f32 %v1710, 0.05
        %v1743 = vmul.f32 %v1200, %v1711
        %v1744 = vmul.f32 %v1202, %v1712
        %v1745 = vmul.f32 %v1204, %v1713
        %v1746 = vmul.f32 %v1206, %v1714
        %v1747 = vmul.f32 %v1208, %v1715
        %v1748 = vmul.f32 %v1210, %v1716
        %v1749 = vmul.f32 %v1212, %v1717
        %v1750 = vmul.f32 %v1214, %v1718
        %v1751 = vmul.f32 %v1216, %v1719
        %v1752 = vmul.f32 %v1218, %v1720
        %v1753 = vmul.f32 %v1220, %v1721
        %v1754 = vmul.f32 %v1222, %v1722
        %v1755 = vmul.f32 %v1224, %v1723
        %v1756 = vmul.f32 %v1226, %v1724
        %v1757 = vmul.f32 %v1228, %v1725
        %v1758 = vmul.f32 %v1230, %v1726
        %v1759 = vmul.f32 %v1232, %v1727
        %v1760 = vmul.f32 %v1234, %v1728
        %v1761 = vmul.f32 %v1236, %v1729
        %v1762 = vmul.f32 %v1238, %v1730
        %v1763 = vmul.f32 %v1240, %v1731
        %v1764 = vmul.f32 %v1242, %v1732
        %v1765 = vmul.f32 %v1244, %v1733
        %v1766 = vmul.f32 %v1246, %v1734
        %v1767 = vmul.f32 %v1248, %v1735
        %v1768 = vmul.f32 %v1250, %v1736
        %v1769 = vmul.f32 %v1252, %v1737
        %v1770 = vmul.f32 %v1254, %v1738
        %v1771 = vmul.f32 %v1256, %v1739
        %v1772 = vmul.f32 %v1258, %v1740
        %v1773 = vmul.f32 %v1260, %v1741
        %v1774 = vmul.f32 %v1262, %v1742
        %v1775 = vmul.f32 %v655, %v1391
        %v1776 = vmul.f32 %v656, %v1392
        %v1777 = vmul.f32 %v657, %v1393
        %v1778 = vmul.f32 %v658, %v1394
        %v1779 = vmul.f32 %v659, %v1395
        %v1780 = vmul.f32 %v660, %v1396
        %v1781 = vmul.f32 %v661, %v1397
        %v1782 = vmul.f32 %v662, %v1398
        %v1783 = vmul.f32 %v663, %v1399
        %v1784 = vmul.f32 %v664, %v1400
        %v1785 = vmul.f32 %v665, %v1401
        %v1786 = vmul.f32 %v666, %v1402
        %v1787 = vmul.f32 %v667, %v1403
        %v1788 = vmul.f32 %v668, %v1404
        %v1789 = vmul.f32 %v669, %v1405
        %v1790 = vmul.f32 %v670, %v1406
        %v1791 = vmul.f32 %v671, %v1407
        %v1792 = vmul.f32 %v672, %v1408
        %v1793 = vmul.f32 %v673, %v1409
        %v1794 = vmul.f32 %v674, %v1410
        %v1795 = vmul.f32 %v675, %v1411
        %v1796 = vmul.f32 %v676, %v1412
        %v1797 = vmul.f32 %v677, %v1413
        %v1798 = vmul.f32 %v678, %v1414
        %v1799 = vmul.f32 %v679, %v1415
        %v1800 = vmul.f32 %v680, %v1416
        %v1801 = vmul.f32 %v681, %v1417
        %v1802 = vmul.f32 %v682, %v1418
        %v1803 = vmul.f32 %v683, %v1419
        %v1804 = vmul.f32 %v684, %v1420
        %v1805 = vmul.f32 %v685, %v1421
        %v1806 = vmul.f32 %v686, %v1422
        %v1807 = vmul.f32 %v687, %v1423
        %v1808 = vmul.f32 %v688, %v1424
        %v1809 = vmul.f32 %v689, %v1425
        %v1810 = vmul.f32 %v690, %v1426
        %v1811 = vmul.f32 %v691, %v1427
        %v1812 = vmul.f32 %v692, %v1428
        %v1813 = vmul.f32 %v693, %v1429
        %v1814 = vmul.f32 %v694, %v1430
        %v1815 = vmul.f32 %v695, %v1431
        %v1816 = vmul.f32 %v696, %v1432
        %v1817 = vmul.f32 %v697, %v1433
        %v1818 = vmul.f32 %v698, %v1434
        %v1819 = vmul.f32 %v699, %v1435
        %v1820 = vmul.f32 %v700, %v1436
        %v1821 = vmul.f32 %v701, %v1437
        %v1822 = vmul.f32 %v702, %v1438
        %v1823 = vmul.f32 %v703, %v1439
        %v1824 = vmul.f32 %v704, %v1440
        %v1825 = vmul.f32 %v705, %v1441
        %v1826 = vmul.f32 %v706, %v1442
        %v1827 = vmul.f32 %v707, %v1443
        %v1828 = vmul.f32 %v708, %v1444
        %v1829 = vmul.f32 %v709, %v1445
        %v1830 = vmul.f32 %v710, %v1446
        %v1831 = vmul.f32 %v711, %v1447
        %v1832 = vmul.f32 %v712, %v1448
        %v1833 = vmul.f32 %v713, %v1449
        %v1834 = vmul.f32 %v714, %v1450
        %v1835 = vmul.f32 %v715, %v1451
        %v1836 = vmul.f32 %v716, %v1452
        %v1837 = vmul.f32 %v717, %v1453
        %v1838 = vmul.f32 %v718, %v1454
        %v1839 = vmul.f32 %v719, %v1455
        %v1840 = vmul.f32 %v720, %v1456
        %v1841 = vmul.f32 %v721, %v1457
        %v1842 = vmul.f32 %v722, %v1458
        %v1843 = vmul.f32 %v723, %v1459
        %v1844 = vmul.f32 %v724, %v1460
        %v1845 = vmul.f32 %v725, %v1461
        %v1846 = vmul.f32 %v726, %v1462
        %v1847 = vmul.f32 %v727, %v1463
        %v1848 = vmul.f32 %v728, %v1464
        %v1849 = vmul.f32 %v729, %v1465
        %v1850 = vmul.f32 %v730, %v1466
        %v1851 = vmul.f32 %v731, %v1467
        %v1852 = vmul.f32 %v732, %v1468
        %v1853 = vmul.f32 %v733, %v1469
        %v1854 = vmul.f32 %v734, %v1470
        %v1855 = vmul.f32 %v735, %v1471
        %v1856 = vmul.f32 %v736, %v1472
        %v1857 = vmul.f32 %v737, %v1473
        %v1858 = vmul.f32 %v738, %v1474
        %v1859 = vmul.f32 %v739, %v1475
        %v1860 = vmul.f32 %v740, %v1476
        %v1861 = vmul.f32 %v741, %v1477
        %v1862 = vmul.f32 %v742, %v1478
        %v1863 = vmul.f32 %v743, %v1479
        %v1864 = vmul.f32 %v744, %v1480
        %v1865 = vmul.f32 %v745, %v1481
        %v1866 = vmul.f32 %v746, %v1482
        %v1867 = vmul.f32 %v747, %v1483
        %v1868 = vmul.f32 %v748, %v1484
        %v1869 = vmul.f32 %v749, %v1485
        %v1870 = vmul.f32 %v750, %v1486
        %v1871 = vmul.f32 %v751, %v1487
        %v1872 = vmul.f32 %v752, %v1488
        %v1873 = vmul.f32 %v753, %v1489
        %v1874 = vmul.f32 %v754, %v1490
        %v1875 = vmul.f32 %v755, %v1491
        %v1876 = vmul.f32 %v756, %v1492
        %v1877 = vmul.f32 %v757, %v1493
        %v1878 = vmul.f32 %v758, %v1494
        %v1879 = vmul.f32 %v759, %v1495
        %v1880 = vmul.f32 %v760, %v1496
        %v1881 = vmul.f32 %v761, %v1497
        %v1882 = vmul.f32 %v762, %v1498
        %v1883 = vmul.f32 %v763, %v1499
        %v1884 = vmul.f32 %v764, %v1500
        %v1885 = vmul.f32 %v765, %v1501
        %v1886 = vmul.f32 %v766, %v1502
        %v1887 = vmul.f32 %v767, %v1503
        %v1888 = vmul.f32 %v768, %v1504
        %v1889 = vmul.f32 %v769, %v1505
        %v1890 = vmul.f32 %v770, %v1506
        %v1891 = vmul.f32 %v771, %v1507
        %v1892 = vmul.f32 %v772, %v1508
        %v1893 = vmul.f32 %v773, %v1509
        %v1894 = vmul.f32 %v774, %v1510
        %v1895 = vmul.f32 %v775, %v1511
        %v1896 = vmul.f32 %v776, %v1512
        %v1897 = vmul.f32 %v777, %v1513
        %v1898 = vmul.f32 %v778, %v1514
        %v1899 = vmul.f32 %v779, %v1515
        %v1900 = vmul.f32 %v780, %v1516
        %v1901 = vmul.f32 %v781, %v1517
        %v1902 = vmul.f32 %v782, %v1518
        %v1903 = vadd.f32 %v1775, %v1776
        %v1904 = vadd.f32 %v1903, %v1777
        %v1905 = vadd.f32 %v1904, %v1778
        %1906 = vadd.xlane.f32.xlu0 %v1905
        %v1907 = vpop.xlane.xlu0 %1906
        %v1908 = vadd.f32 %v1779, %v1780
        %v1909 = vadd.f32 %v1908, %v1781
        %v1910 = vadd.f32 %v1909, %v1782
        %1911 = vadd.xlane.f32.xlu0 %v1910
        %v1912 = vpop.xlane.xlu0 %1911
        %v1913 = vadd.f32 %v1783, %v1784
        %v1914 = vadd.f32 %v1913, %v1785
        %v1915 = vadd.f32 %v1914, %v1786
        %1916 = vadd.xlane.f32.xlu0 %v1915
        %v1917 = vpop.xlane.xlu0 %1916
        %v1918 = vadd.f32 %v1787, %v1788
        %v1919 = vadd.f32 %v1918, %v1789
        %v1920 = vadd.f32 %v1919, %v1790
        %1921 = vadd.xlane.f32.xlu0 %v1920
        %v1922 = vpop.xlane.xlu0 %1921
        %v1923 = vadd.f32 %v1791, %v1792
        %v1924 = vadd.f32 %v1923, %v1793
        %v1925 = vadd.f32 %v1924, %v1794
        %1926 = vadd.xlane.f32.xlu0 %v1925
        %v1927 = vpop.xlane.xlu0 %1926
        %v1928 = vadd.f32 %v1795, %v1796
        %v1929 = vadd.f32 %v1928, %v1797
        %v1930 = vadd.f32 %v1929, %v1798
        %1931 = vadd.xlane.f32.xlu0 %v1930
        %v1932 = vpop.xlane.xlu0 %1931
        %v1933 = vadd.f32 %v1799, %v1800
        %v1934 = vadd.f32 %v1933, %v1801
        %v1935 = vadd.f32 %v1934, %v1802
        %1936 = vadd.xlane.f32.xlu0 %v1935
        %v1937 = vpop.xlane.xlu0 %1936
        %v1938 = vadd.f32 %v1803, %v1804
        %v1939 = vadd.f32 %v1938, %v1805
        %v1940 = vadd.f32 %v1939, %v1806
        %1941 = vadd.xlane.f32.xlu0 %v1940
        %v1942 = vpop.xlane.xlu0 %1941
        %v1943 = vadd.f32 %v1807, %v1808
        %v1944 = vadd.f32 %v1943, %v1809
        %v1945 = vadd.f32 %v1944, %v1810
        %1946 = vadd.xlane.f32.xlu0 %v1945
        %v1947 = vpop.xlane.xlu0 %1946
        %v1948 = vadd.f32 %v1811, %v1812
        %v1949 = vadd.f32 %v1948, %v1813
        %v1950 = vadd.f32 %v1949, %v1814
        %1951 = vadd.xlane.f32.xlu0 %v1950
        %v1952 = vpop.xlane.xlu0 %1951
        %v1953 = vadd.f32 %v1815, %v1816
        %v1954 = vadd.f32 %v1953, %v1817
        %v1955 = vadd.f32 %v1954, %v1818
        %1956 = vadd.xlane.f32.xlu0 %v1955
        %v1957 = vpop.xlane.xlu0 %1956
        %v1958 = vadd.f32 %v1819, %v1820
        %v1959 = vadd.f32 %v1958, %v1821
        %v1960 = vadd.f32 %v1959, %v1822
        %1961 = vadd.xlane.f32.xlu0 %v1960
        %v1962 = vpop.xlane.xlu0 %1961
        %v1963 = vadd.f32 %v1823, %v1824
        %v1964 = vadd.f32 %v1963, %v1825
        %v1965 = vadd.f32 %v1964, %v1826
        %1966 = vadd.xlane.f32.xlu0 %v1965
        %v1967 = vpop.xlane.xlu0 %1966
        %v1968 = vadd.f32 %v1827, %v1828
        %v1969 = vadd.f32 %v1968, %v1829
        %v1970 = vadd.f32 %v1969, %v1830
        %1971 = vadd.xlane.f32.xlu0 %v1970
        %v1972 = vpop.xlane.xlu0 %1971
        %v1973 = vadd.f32 %v1831, %v1832
        %v1974 = vadd.f32 %v1973, %v1833
        %v1975 = vadd.f32 %v1974, %v1834
        %1976 = vadd.xlane.f32.xlu0 %v1975
        %v1977 = vpop.xlane.xlu0 %1976
        %v1978 = vadd.f32 %v1835, %v1836
        %v1979 = vadd.f32 %v1978, %v1837
        %v1980 = vadd.f32 %v1979, %v1838
        %1981 = vadd.xlane.f32.xlu0 %v1980
        %v1982 = vpop.xlane.xlu0 %1981
        %v1983 = vadd.f32 %v1839, %v1840
        %v1984 = vadd.f32 %v1983, %v1841
        %v1985 = vadd.f32 %v1984, %v1842
        %1986 = vadd.xlane.f32.xlu0 %v1985
        %v1987 = vpop.xlane.xlu0 %1986
        %v1988 = vadd.f32 %v1843, %v1844
        %v1989 = vadd.f32 %v1988, %v1845
        %v1990 = vadd.f32 %v1989, %v1846
        %1991 = vadd.xlane.f32.xlu0 %v1990
        %v1992 = vpop.xlane.xlu0 %1991
        %v1993 = vadd.f32 %v1847, %v1848
        %v1994 = vadd.f32 %v1993, %v1849
        %v1995 = vadd.f32 %v1994, %v1850
        %1996 = vadd.xlane.f32.xlu0 %v1995
        %v1997 = vpop.xlane.xlu0 %1996
        %v1998 = vadd.f32 %v1851, %v1852
        %v1999 = vadd.f32 %v1998, %v1853
        %v2000 = vadd.f32 %v1999, %v1854
        %2001 = vadd.xlane.f32.xlu0 %v2000
        %v2002 = vpop.xlane.xlu0 %2001
        %v2003 = vadd.f32 %v1855, %v1856
        %v2004 = vadd.f32 %v2003, %v1857
        %v2005 = vadd.f32 %v2004, %v1858
        %2006 = vadd.xlane.f32.xlu0 %v2005
        %v2007 = vpop.xlane.xlu0 %2006
        %v2008 = vadd.f32 %v1859, %v1860
        %v2009 = vadd.f32 %v2008, %v1861
        %v2010 = vadd.f32 %v2009, %v1862
        %2011 = vadd.xlane.f32.xlu0 %v2010
        %v2012 = vpop.xlane.xlu0 %2011
        %v2013 = vadd.f32 %v1863, %v1864
        %v2014 = vadd.f32 %v2013, %v1865
        %v2015 = vadd.f32 %v2014, %v1866
        %2016 = vadd.xlane.f32.xlu0 %v2015
        %v2017 = vpop.xlane.xlu0 %2016
        %v2018 = vadd.f32 %v1867, %v1868
        %v2019 = vadd.f32 %v2018, %v1869
        %v2020 = vadd.f32 %v2019, %v1870
        %2021 = vadd.xlane.f32.xlu0 %v2020
        %v2022 = vpop.xlane.xlu0 %2021
        %v2023 = vadd.f32 %v1871, %v1872
        %v2024 = vadd.f32 %v2023, %v1873
        %v2025 = vadd.f32 %v2024, %v1874
        %2026 = vadd.xlane.f32.xlu0 %v2025
        %v2027 = vpop.xlane.xlu0 %2026
        %v2028 = vadd.f32 %v1875, %v1876
        %v2029 = vadd.f32 %v2028, %v1877
        %v2030 = vadd.f32 %v2029, %v1878
        %2031 = vadd.xlane.f32.xlu0 %v2030
        %v2032 = vpop.xlane.xlu0 %2031
        %v2033 = vadd.f32 %v1879, %v1880
        %v2034 = vadd.f32 %v2033, %v1881
        %v2035 = vadd.f32 %v2034, %v1882
        %2036 = vadd.xlane.f32.xlu0 %v2035
        %v2037 = vpop.xlane.xlu0 %2036
        %v2038 = vadd.f32 %v1883, %v1884
        %v2039 = vadd.f32 %v2038, %v1885
        %v2040 = vadd.f32 %v2039, %v1886
        %2041 = vadd.xlane.f32.xlu0 %v2040
        %v2042 = vpop.xlane.xlu0 %2041
        %v2043 = vadd.f32 %v1887, %v1888
        %v2044 = vadd.f32 %v2043, %v1889
        %v2045 = vadd.f32 %v2044, %v1890
        %2046 = vadd.xlane.f32.xlu0 %v2045
        %v2047 = vpop.xlane.xlu0 %2046
        %v2048 = vadd.f32 %v1891, %v1892
        %v2049 = vadd.f32 %v2048, %v1893
        %v2050 = vadd.f32 %v2049, %v1894
        %2051 = vadd.xlane.f32.xlu0 %v2050
        %v2052 = vpop.xlane.xlu0 %2051
        %v2053 = vadd.f32 %v1895, %v1896
        %v2054 = vadd.f32 %v2053, %v1897
        %v2055 = vadd.f32 %v2054, %v1898
        %2056 = vadd.xlane.f32.xlu0 %v2055
        %v2057 = vpop.xlane.xlu0 %2056
        %v2058 = vadd.f32 %v1899, %v1900
        %v2059 = vadd.f32 %v2058, %v1901
        %v2060 = vadd.f32 %v2059, %v1902
        %2061 = vadd.xlane.f32.xlu0 %v2060
        %v2062 = vpop.xlane.xlu0 %2061
        %v2063 = vsub.f32 %v1743, %v1907
        %v2064 = vsub.f32 %v1744, %v1912
        %v2065 = vsub.f32 %v1745, %v1917
        %v2066 = vsub.f32 %v1746, %v1922
        %v2067 = vsub.f32 %v1747, %v1927
        %v2068 = vsub.f32 %v1748, %v1932
        %v2069 = vsub.f32 %v1749, %v1937
        %v2070 = vsub.f32 %v1750, %v1942
        %v2071 = vsub.f32 %v1751, %v1947
        %v2072 = vsub.f32 %v1752, %v1952
        %v2073 = vsub.f32 %v1753, %v1957
        %v2074 = vsub.f32 %v1754, %v1962
        %v2075 = vsub.f32 %v1755, %v1967
        %v2076 = vsub.f32 %v1756, %v1972
        %v2077 = vsub.f32 %v1757, %v1977
        %v2078 = vsub.f32 %v1758, %v1982
        %v2079 = vsub.f32 %v1759, %v1987
        %v2080 = vsub.f32 %v1760, %v1992
        %v2081 = vsub.f32 %v1761, %v1997
        %v2082 = vsub.f32 %v1762, %v2002
        %v2083 = vsub.f32 %v1763, %v2007
        %v2084 = vsub.f32 %v1764, %v2012
        %v2085 = vsub.f32 %v1765, %v2017
        %v2086 = vsub.f32 %v1766, %v2022
        %v2087 = vsub.f32 %v1767, %v2027
        %v2088 = vsub.f32 %v1768, %v2032
        %v2089 = vsub.f32 %v1769, %v2037
        %v2090 = vsub.f32 %v1770, %v2042
        %v2091 = vsub.f32 %v1771, %v2047
        %v2092 = vsub.f32 %v1772, %v2052
        %v2093 = vsub.f32 %v1773, %v2057
        %v2094 = vsub.f32 %v1774, %v2062
        %vm2095 = vcmask 7168
        %2096 = vst.msk [vmem:[%s237] sm:$0xff] %vm2095, %v2063
        %2097 = vst.msk [vmem:[%s237 + $0x8] sm:$0xff] %vm2095, %v2064
        %2098 = vst.msk [vmem:[%s237 + $0x10] sm:$0xff] %vm2095, %v2065
        %2099 = vst.msk [vmem:[%s237 + $0x18] sm:$0xff] %vm2095, %v2066
        %2100 = vst.msk [vmem:[%s237 + $0x20] sm:$0xff] %vm2095, %v2067
        %2101 = vst.msk [vmem:[%s237 + $0x28] sm:$0xff] %vm2095, %v2068
        %2102 = vst.msk [vmem:[%s237 + $0x30] sm:$0xff] %vm2095, %v2069
        %2103 = vst.msk [vmem:[%s237 + $0x38] sm:$0xff] %vm2095, %v2070
        %2104 = vst.msk [vmem:[%s237 + $0x40] sm:$0xff] %vm2095, %v2071
        %2105 = vst.msk [vmem:[%s237 + $0x48] sm:$0xff] %vm2095, %v2072
        %2106 = vst.msk [vmem:[%s237 + $0x50] sm:$0xff] %vm2095, %v2073
        %2107 = vst.msk [vmem:[%s237 + $0x58] sm:$0xff] %vm2095, %v2074
        %2108 = vst.msk [vmem:[%s237 + $0x60] sm:$0xff] %vm2095, %v2075
        %2109 = vst.msk [vmem:[%s237 + $0x68] sm:$0xff] %vm2095, %v2076
        %2110 = vst.msk [vmem:[%s237 + $0x70] sm:$0xff] %vm2095, %v2077
        %2111 = vst.msk [vmem:[%s237 + $0x78] sm:$0xff] %vm2095, %v2078
        %2112 = vst.msk [vmem:[%s237 + $0x80] sm:$0xff] %vm2095, %v2079
        %2113 = vst.msk [vmem:[%s237 + $0x88] sm:$0xff] %vm2095, %v2080
        %2114 = vst.msk [vmem:[%s237 + $0x90] sm:$0xff] %vm2095, %v2081
        %2115 = vst.msk [vmem:[%s237 + $0x98] sm:$0xff] %vm2095, %v2082
        %2116 = vst.msk [vmem:[%s237 + $0xa0] sm:$0xff] %vm2095, %v2083
        %2117 = vst.msk [vmem:[%s237 + $0xa8] sm:$0xff] %vm2095, %v2084
        %2118 = vst.msk [vmem:[%s237 + $0xb0] sm:$0xff] %vm2095, %v2085
        %2119 = vst.msk [vmem:[%s237 + $0xb8] sm:$0xff] %vm2095, %v2086
        %2120 = vst.msk [vmem:[%s237 + $0xc0] sm:$0xff] %vm2095, %v2087
        %2121 = vst.msk [vmem:[%s237 + $0xc8] sm:$0xff] %vm2095, %v2088
        %2122 = vst.msk [vmem:[%s237 + $0xd0] sm:$0xff] %vm2095, %v2089
        %2123 = vst.msk [vmem:[%s237 + $0xd8] sm:$0xff] %vm2095, %v2090
        %2124 = vst.msk [vmem:[%s237 + $0xe0] sm:$0xff] %vm2095, %v2091
        %2125 = vst.msk [vmem:[%s237 + $0xe8] sm:$0xff] %vm2095, %v2092
        %2126 = vst.msk [vmem:[%s237 + $0xf0] sm:$0xff] %vm2095, %v2093
        %2127 = vst.msk [vmem:[%s237 + $0xf8] sm:$0xff] %vm2095, %v2094
        %s2128 = smul.u32 32, %s19
        %p2129 = scmp.lt.s32.totalorder %s2128, 63
        %s2130 = scalar_select %p2129, %s2128, 63
        %s2131 = smul.addr %s2130, 8
        %s2132 = scalar_lea.vmem %s2, %s2131
        // Predicated region
        $region37: #{tpu_custom_call.1} parent=27 // pred_check
          %p2133 = pneg %p89
        $region38: #{tpu_custom_call.1} parent=27 // pred_check_branch
          %2135 = sbr.rel (%p2133) target = $region40
        $region39: #{tpu_custom_call.1} parent=27 // pred_region
          %s2136 = smul.u32 32, %s19
        $region40: #{tpu_custom_call.1} parent=27 // pred_fallthru
          _
      $region28: #{tpu_custom_call.1} parent=5 // pred_fallthru
        _
      %p2137 = scmp.le.s32.totalorder 2, %s14
      // Predicated region
      $region41: #{tpu_custom_call.1} parent=5 // pred_check
        %p2138 = pneg %p2137
      $region42: #{tpu_custom_call.1} parent=5 // pred_check_branch
        %2140 = sbr.rel (%p2138) target = $region44
      $region43: #{tpu_custom_call.1} parent=5 // pred_region
        %s2141 = ssub.s32 %s14, 2
        // Predicated region
        $region45: #{tpu_custom_call.1} parent=43 // pred_check
          %p2142 = pneg %p95
        $region46: #{tpu_custom_call.1} parent=43 // pred_check_branch
          %2144 = sbr.rel (%p2142) target = $region48
        $region47: #{tpu_custom_call.1} parent=43 // pred_region
          %s2145 = smul.u32 32, %s20
          %p2146 = scmp.lt.s32.totalorder %s2145, 63
          %s2147 = scalar_select %p2146, %s2145, 63
          %s2148 = smul.addr %s2147, 8
          %s2149 = scalar_lea.vmem %s2, %s2148
        $region48: #{tpu_custom_call.1} parent=43 // pred_fallthru
          _
      $region44: #{tpu_custom_call.1} parent=5 // pred_fallthru
        _
    $region6: #{tpu_custom_call.1} parent=1 // loop_footer
      %s18 = sadd.s32 1, %s14
    $region7: #{tpu_custom_call.1} parent=1 // loop_footer_branch
      %13 = sbr.rel target = $region3
    $region8: #{tpu_custom_call.1} parent=1 // loop_exit
      _
    %2150 = vsyncpa [#allocation3], 1
    %s2151 = scalar_lea.sflag [#allocation3], 1
    %2152 = vsyncpa %s2151, 1
    %2153 = vsyncpa [#allocation5], 1
    %s2154 = scalar_lea.sflag [#allocation5], 1
    %2155 = vsyncpa %s2154, 1

</llo_original>
